<compile_context>
chip_gen: v5e
topology: v5e:2x2
jax: 0.10.0
libtpu: 0.0.40
codegen_flags: <defaults>
</compile_context>

<pallas_src>
import functools

import jax
import jax.numpy as jnp
from jax import lax
from jax.experimental import pallas as pl
from jax.experimental.pallas import tpu as pltpu

LANE = 128


def _round_up(x, m):
    return (x + m - 1) // m * m


def chebnet_kernel(lhat_ref, x_ref, w01_ref, w11_ref, b1_ref,
                   w02_ref, w12_ref, b2_ref, cmask_ref, o_ref,
                   local_scr, acc_scr, *, tm, symmetric):
    """Fused 2-layer ChebConv(K=2) + relu + masked log_softmax.

    grid = (phase, row_tile).
      phase 0: per row tile, h = relu(conv1(x)); store the layer-2 local term
               (h @ W0_2 + b2) and either accumulate L_hat^T @ (h @ W1_2)
               (symmetric path) or store h @ W1_2 (generic path) in VMEM.
      phase 1: logits = local + aggregated term, masked log_softmax, store.
    """
    phase = pl.program_id(0)
    tile = pl.program_id(1)
    row = pl.multiple_of(tile * tm, tm)

    @pl.when(phase == 0)
    def _layer1():
        lhat = lhat_ref[...]                                   # (TM, Npad) bf16
        x_all = x_ref[...]                                     # (Npad, Fpad) bf16
        x_t = x_ref[pl.ds(row, tm), :]                         # (TM, Fpad) bf16
        # propagate first, then project:  (L_hat @ x) @ W1_1
        tx = jnp.dot(lhat, x_all, preferred_element_type=jnp.float32)
        h = (jnp.dot(x_t, w01_ref[...], preferred_element_type=jnp.float32)
             + jnp.dot(tx.astype(jnp.bfloat16), w11_ref[...],
                       preferred_element_type=jnp.float32)
             + b1_ref[...])
        h = jnp.maximum(h, 0.0)                                # relu (dropout=id)
        h16 = h.astype(jnp.bfloat16)

        # layer-2 local term finalized now -> h never needs to be re-read.
        local_scr[pl.ds(row, tm), :] = (
            jnp.dot(h16, w02_ref[...], preferred_element_type=jnp.float32)
            + b2_ref[...])

        hw1 = jnp.dot(h16, w12_ref[...],
                      preferred_element_type=jnp.float32).astype(jnp.bfloat16)

        if symmetric:
            # L_hat == L_hat^T  =>  L_hat @ (h @ W1_2)
            #   = sum over row tiles of  L_hat_panel^T @ hw1_tile.
            # Accumulate here so L_hat is streamed exactly once overall.
            @pl.when(tile == 0)
            def _init():
                acc_scr[...] = jnp.zeros_like(acc_scr)
            acc_scr[...] += lax.dot_general(
                lhat, hw1,
                dimension_numbers=(((0,), (0,)), ((), ())),    # contract dim 0 / dim 0
                preferred_element_type=jnp.float32)
        else:
            acc_scr[pl.ds(row, tm), :] = hw1

    @pl.when(phase == 1)
    def _layer2():
        if symmetric:
            agg = acc_scr[pl.ds(row, tm), :]                   # already propagated
        else:
            agg = jnp.dot(lhat_ref[...], acc_scr[...],
                          preferred_element_type=jnp.float32)  # L_hat @ (h @ W1_2)
        logits = local_scr[pl.ds(row, tm), :] + agg            # (TM, Cpad) f32
        # log_softmax with precomputed additive mask (-1e30 on padded classes)
        masked = logits + cmask_ref[...]
        m = jnp.max(masked, axis=1, keepdims=True)
        s = jnp.sum(jnp.exp(masked - m), axis=1, keepdims=True)
        o_ref[...] = (masked - (m + jnp.log(s))).astype(o_ref.dtype)


def chebnet_forward(params, x, lhat, num_classes, assume_symmetric=None):
    """Pad to TPU-friendly shapes, run the fused kernel, slice back."""
    n, fin = x.shape
    hid = params["w0_1"].shape[1]

    fpad = _round_up(fin, LANE)
    hpad = _round_up(hid, LANE)
    cpad = _round_up(num_classes, LANE)

    if assume_symmetric is None:
        # 'sym' normalization of an undirected graph gives a symmetric L_hat.
        assume_symmetric = bool(jnp.allclose(lhat, lhat.T, atol=1e-6))

    buffered_ok = hasattr(pl, "Buffered")
    res_bufs = 1 if buffered_ok else 2

    # VMEM budget: v7x has 64 MiB per TensorCore, v5e/v6e have 128 MiB.
    try:
        vmem_cap = int(pltpu.get_tpu_info().vmem_capacity_bytes)
    except Exception:  # conservative default (v7x)
        vmem_cap = 64 * 1024 * 1024
    budget = int(vmem_cap * 0.85)

    def footprint(tm):
        npad_ = _round_up(n, tm)
        b = 2 * tm * npad_ * 2                                  # streamed L_hat panels (x2 buf)
        b += res_bufs * npad_ * fpad * 2                        # resident x
        b += res_bufs * 2 * (fpad * hpad + hpad * cpad) * 2     # weights
        b += res_bufs * (hpad + 2 * cpad) * 4                   # biases + class mask
        b += 2 * tm * cpad * 4                                  # output blocks
        b += npad_ * cpad * 4                                   # local-term scratch
        b += npad_ * cpad * (4 if assume_symmetric else 2)      # agg / hw1 scratch
        return b

    if n < 128:
        tm = _round_up(max(n, 16), 16)       # bf16 native sublane tile is 16 rows
    else:
        tm = 128
        for cand in (512, 256, 128):
            if cand <= _round_up(n, 128) and footprint(cand) <= budget:
                tm = cand
                break
    # TODO(synk): if even tm=128 overflows `budget` (huge graphs, wide features),
    # stream x over the contraction in K-chunks with a nested pltpu.emit_pipeline.
    npad = _round_up(n, tm)
    n_tiles = npad // tm
    vmem_limit = int(min(budget, max(32 * 1024 * 1024, 2 * footprint(tm))))

    def pad2(a, r, c):
        return jnp.pad(a, ((0, r - a.shape[0]), (0, c - a.shape[1])))

    lhat_p = pad2(lhat, npad, npad).astype(jnp.bfloat16)
    x_p = pad2(x, npad, fpad).astype(jnp.bfloat16)
    w01 = pad2(params["w0_1"], fpad, hpad).astype(jnp.bfloat16)
    w11 = pad2(params["w1_1"], fpad, hpad).astype(jnp.bfloat16)
    b1 = pad2(params["b_1"], 1, hpad).astype(jnp.float32)
    w02 = pad2(params["w0_2"], hpad, cpad).astype(jnp.bfloat16)
    w12 = pad2(params["w1_2"], hpad, cpad).astype(jnp.bfloat16)
    b2 = pad2(params["b_2"], 1, cpad).astype(jnp.float32)
    # additive class-padding mask, hoisted out of the kernel body
    cmask = jnp.where(jnp.arange(cpad) < num_classes, 0.0, -1e30
                      ).astype(jnp.float32)[None, :]

    kernel = functools.partial(chebnet_kernel, tm=tm, symmetric=assume_symmetric)

    if assume_symmetric:
        # Phase 1 never reads L_hat: keep its block pinned to the last phase-0
        # panel so the single streaming pass in phase 0 is the only L_hat DMA.
        lhat_map = lambda p, i: (i * (1 - p) + (n_tiles - 1) * p, 0)
        lhat_passes = 1
    else:
        lhat_map = lambda p, i: (i, 0)
        lhat_passes = 2
    acc_dtype = jnp.float32 if assume_symmetric else jnp.bfloat16

    cost = pl.CostEstimate(
        flops=int(2 * npad * npad * (fpad + cpad)
                  + 2 * npad * (2 * fpad * hpad + 2 * hpad * cpad)),
        transcendentals=int(npad * cpad),
        bytes_accessed=int(lhat_passes * npad * npad * 2
                           + npad * fpad * 2
                           + 2 * (fpad * hpad + hpad * cpad) * 2
                           + (hpad + 2 * cpad) * 4
                           + npad * cpad * 4),
    )

    def build_and_run(single_buffer_residents):
        def resident(shape):
            if single_buffer_residents:
                # constant block index -> one VMEM copy is enough
                return pl.BlockSpec(shape, lambda p, i: (0, 0),
                                    pipeline_mode=pl.Buffered(1))
            return pl.BlockSpec(shape, lambda p, i: (0, 0))

        return pl.pallas_call(
            kernel,
            out_shape=jax.ShapeDtypeStruct((npad, cpad), jnp.float32),
            grid=(2, n_tiles),
            in_specs=[
                pl.BlockSpec((tm, npad), lhat_map),   # L_hat row panel (streamed)
                resident((npad, fpad)),               # x (fully resident)
                resident((fpad, hpad)),               # W0_1
                resident((fpad, hpad)),               # W1_1
                resident((1, hpad)),                  # b_1
                resident((hpad, cpad)),               # W0_2
                resident((hpad, cpad)),               # W1_2
                resident((1, cpad)),                  # b_2
                resident((1, cpad)),                  # class-padding mask
            ],
            # collapse all phase-0 steps onto block 0 -> no phase-0 writebacks;
            # every output block is written exactly once, in phase 1.
            out_specs=pl.BlockSpec((tm, cpad), lambda p, i: (i * p, 0)),
            scratch_shapes=[
                pltpu.VMEM((npad, cpad), jnp.float32),   # h @ W0_2 + b2
                pltpu.VMEM((npad, cpad), acc_dtype),     # sym: f32 L_hat@(h@W1_2) acc ; else bf16 h@W1_2
            ],
            compiler_params=pltpu.CompilerParams(
                # phase axis and the scratch-accumulating tile axis are both
                # sequential.  TODO(synk): v7x dual-TC sharding of the tile axis
                # would need VMEM_SHARED scratch + core_barrier between phases.
                dimension_semantics=("arbitrary", "arbitrary"),
                vmem_limit_bytes=vmem_limit,
            ),
            cost_estimate=cost,
        )(lhat_p, x_p, w01, w11, b1, w02, w12, b2, cmask)

    if buffered_ok:
        try:
            out_p = build_and_run(True)
        except Exception:
            # compatibility fallback if Buffered(1) pipeline_mode is rejected
            out_p = build_and_run(False)
    else:
        out_p = build_and_run(False)

    return out_p[:n, :num_classes]


def chebnet_reference(params, x, lhat):
    """Pure-JAX f32 reference for correctness checking."""
    h = x @ params["w0_1"] + (lhat @ x) @ params["w1_1"] + params["b_1"]
    h = jnp.maximum(h, 0.0)
    z = h @ params["w0_2"] + (lhat @ h) @ params["w1_2"] + params["b_2"]
    return jax.nn.log_softmax(z, axis=1)


def build_scaled_laplacian(edge_index, num_nodes):
    """Dense L_hat = 2/lambda_max * (I - D^-1/2 A D^-1/2) - I with lambda_max=2
    => L_hat = -D^-1/2 A D^-1/2 (PyG ChebConv 'sym' default)."""
    src, dst = edge_index[0], edge_index[1]
    A = jnp.zeros((num_nodes, num_nodes), jnp.float32)
    A = A.at[src, dst].add(1.0)
    deg = A.sum(axis=1)
    d_inv_sqrt = jnp.where(deg > 0, jax.lax.rsqrt(jnp.maximum(deg, 1e-12)), 0.0)
    return -(d_inv_sqrt[:, None] * A * d_inv_sqrt[None, :])


def glorot(key, shape):
    fan_in, fan_out = shape
    limit = (6.0 / (fan_in + fan_out)) ** 0.5
    return jax.random.uniform(key, shape, jnp.float32, -limit, limit)


if __name__ == "__main__":
    N = 16                 # num nodes
    NUM_FEATURES = 4       # dataset.num_node_features
    HIDDEN = 16            # ChebConv hidden width
    NUM_CLASSES = 4        # dataset.num_classes

    key = jax.random.PRNGKey(0)
    k_x, k1, k2, k3, k4 = jax.random.split(key, 5)

    # Node features
    x = jax.random.normal(k_x, (N, NUM_FEATURES), jnp.float32)

    # Edge index: undirected ring graph (both directions), shape [2, 2N]
    idx = jnp.arange(N)
    src = jnp.concatenate([idx, (idx + 1) % N])
    dst = jnp.concatenate([(idx + 1) % N, idx])
    edge_index = jnp.stack([src, dst], axis=0)

    lhat = build_scaled_laplacian(edge_index, N)

    # Deterministic parameter init (glorot weights, zero bias, like PyG ChebConv)
    params = {
        "w0_1": glorot(k1, (NUM_FEATURES, HIDDEN)),
        "w1_1": glorot(k2, (NUM_FEATURES, HIDDEN)),
        "b_1": jnp.zeros((1, HIDDEN), jnp.float32),
        "w0_2": glorot(k3, (HIDDEN, NUM_CLASSES)),
        "w1_2": glorot(k4, (HIDDEN, NUM_CLASSES)),
        "b_2": jnp.zeros((1, NUM_CLASSES), jnp.float32),
    }

    out = chebnet_forward(params, x, lhat, NUM_CLASSES)
    out = jax.block_until_ready(out)

    assert out.shape == (N, NUM_CLASSES)
    # log_softmax rows should sum (in prob space) to ~1
    assert jnp.allclose(jnp.exp(out).sum(axis=1), 1.0, atol=1e-3)
    # compare against the f32 pure-JAX reference (bf16 matmul tolerance)
    ref = chebnet_reference(params, x, lhat)
    max_err = float(jnp.max(jnp.abs(out - ref)))
    assert max_err < 5e-2, f"max abs error vs reference: {max_err}"

    print("KERNEL_OK")
</pallas_src>

<mosaic_0001>
module attributes {stable_mosaic.version = 11 : i64} {
  func.func @chebnet_kernel(%arg0: i32, %arg1: i32, %arg2: memref<16x16xbf16, #tpu.memory_space<vmem>>, %arg3: memref<16x128xbf16, #tpu.memory_space<vmem>>, %arg4: memref<128x128xbf16, #tpu.memory_space<vmem>>, %arg5: memref<128x128xbf16, #tpu.memory_space<vmem>>, %arg6: memref<1x128xf32, #tpu.memory_space<vmem>>, %arg7: memref<128x128xbf16, #tpu.memory_space<vmem>>, %arg8: memref<128x128xbf16, #tpu.memory_space<vmem>>, %arg9: memref<1x128xf32, #tpu.memory_space<vmem>>, %arg10: memref<1x128xf32, #tpu.memory_space<vmem>>, %arg11: memref<16x128xf32, #tpu.memory_space<vmem>>, %arg12: memref<16x128xf32, #tpu.memory_space<vmem>>, %arg13: memref<16x128xf32, #tpu.memory_space<vmem>>) attributes {dimension_semantics = [#tpu.dimension_semantics<arbitrary>, #tpu.dimension_semantics<arbitrary>], iteration_bounds = array<i64: 2, 1>, scalar_prefetch = 0 : i64, scratch_operands = 2 : i64, tpu.core_type = #tpu.core_type<tc>, window_params = [{transform_indices = @transform_0, window_bounds = array<i64: 16, 16>}, {pipeline_mode = #tpu.pipeline_mode<synchronous>, transform_indices = @transform_1, window_bounds = array<i64: 16, 128>}, {pipeline_mode = #tpu.pipeline_mode<synchronous>, transform_indices = @transform_2, window_bounds = array<i64: 128, 128>}, {pipeline_mode = #tpu.pipeline_mode<synchronous>, transform_indices = @transform_3, window_bounds = array<i64: 128, 128>}, {pipeline_mode = #tpu.pipeline_mode<synchronous>, transform_indices = @transform_4, window_bounds = array<i64: 1, 128>}, {pipeline_mode = #tpu.pipeline_mode<synchronous>, transform_indices = @transform_5, window_bounds = array<i64: 128, 128>}, {pipeline_mode = #tpu.pipeline_mode<synchronous>, transform_indices = @transform_6, window_bounds = array<i64: 128, 128>}, {pipeline_mode = #tpu.pipeline_mode<synchronous>, transform_indices = @transform_7, window_bounds = array<i64: 1, 128>}, {pipeline_mode = #tpu.pipeline_mode<synchronous>, transform_indices = @transform_8, window_bounds = array<i64: 1, 128>}, {transform_indices = @transform_9, window_bounds = array<i64: 16, 128>}]} {
    %c16_i32 = arith.constant 16 : i32
    %0 = arith.muli %arg1, %c16_i32 : i32
    %1 = tpu.assume_multiple %0, 16 : i32
    %c0_i32 = arith.constant 0 : i32
    %2 = arith.cmpi eq, %arg0, %c0_i32 : i32
    %3 = arith.extui %2 : i1 to i32
    %c0_i32_0 = arith.constant 0 : i32
    %4 = arith.cmpi ne, %3, %c0_i32_0 : i32
    scf.if %4 {
      %c0 = arith.constant 0 : index
      %c0_2 = arith.constant 0 : index
      %8 = vector.load %arg2[%c0, %c0_2] : memref<16x16xbf16, #tpu.memory_space<vmem>>, vector<16x16xbf16>
      %c0_3 = arith.constant 0 : index
      %c0_4 = arith.constant 0 : index
      %9 = vector.load %arg3[%c0_3, %c0_4] : memref<16x128xbf16, #tpu.memory_space<vmem>>, vector<16x128xbf16>
      %10 = arith.index_cast %1 : i32 to index
      %c0_5 = arith.constant 0 : index
      %11 = vector.load %arg3[%10, %c0_5] : memref<16x128xbf16, #tpu.memory_space<vmem>>, vector<16x128xbf16>
      %cst = arith.constant dense<0.000000e+00> : vector<16x128xf32>
      %12 = tpu.matmul %8, %9, %cst {dimension_numbers = #tpu.dot_dimension_numbers<[1], [0], [0], [1], [0, 0, 1, 1], [], []>} : vector<16x16xbf16>, vector<16x128xbf16>, vector<16x128xf32> -> vector<16x128xf32>
      %c0_6 = arith.constant 0 : index
      %c0_7 = arith.constant 0 : index
      %13 = vector.load %arg4[%c0_6, %c0_7] : memref<128x128xbf16, #tpu.memory_space<vmem>>, vector<128x128xbf16>
      %cst_8 = arith.constant dense<0.000000e+00> : vector<16x128xf32>
      %14 = tpu.matmul %11, %13, %cst_8 {dimension_numbers = #tpu.dot_dimension_numbers<[1], [0], [0], [1], [0, 0, 1, 1], [], []>} : vector<16x128xbf16>, vector<128x128xbf16>, vector<16x128xf32> -> vector<16x128xf32>
      %15 = arith.truncf %12 : vector<16x128xf32> to vector<16x128xbf16>
      %c0_9 = arith.constant 0 : index
      %c0_10 = arith.constant 0 : index
      %16 = vector.load %arg5[%c0_9, %c0_10] : memref<128x128xbf16, #tpu.memory_space<vmem>>, vector<128x128xbf16>
      %cst_11 = arith.constant dense<0.000000e+00> : vector<16x128xf32>
      %17 = tpu.matmul %15, %16, %cst_11 {dimension_numbers = #tpu.dot_dimension_numbers<[1], [0], [0], [1], [0, 0, 1, 1], [], []>} : vector<16x128xbf16>, vector<128x128xbf16>, vector<16x128xf32> -> vector<16x128xf32>
      %18 = arith.addf %14, %17 : vector<16x128xf32>
      %c0_12 = arith.constant 0 : index
      %c0_13 = arith.constant 0 : index
      %19 = vector.load %arg6[%c0_12, %c0_13] : memref<1x128xf32, #tpu.memory_space<vmem>>, vector<1x128xf32>
      %20 = vector.broadcast %19 : vector<1x128xf32> to vector<16x128xf32>
      %21 = arith.addf %18, %20 : vector<16x128xf32>
      %cst_14 = arith.constant 0.000000e+00 : f32
      %22 = vector.broadcast %cst_14 : f32 to vector<16x128xf32>
      %23 = arith.maximumf %21, %22 : vector<16x128xf32>
      %24 = arith.truncf %23 : vector<16x128xf32> to vector<16x128xbf16>
      %c0_15 = arith.constant 0 : index
      %c0_16 = arith.constant 0 : index
      %25 = vector.load %arg7[%c0_15, %c0_16] : memref<128x128xbf16, #tpu.memory_space<vmem>>, vector<128x128xbf16>
      %cst_17 = arith.constant dense<0.000000e+00> : vector<16x128xf32>
      %26 = tpu.matmul %24, %25, %cst_17 {dimension_numbers = #tpu.dot_dimension_numbers<[1], [0], [0], [1], [0, 0, 1, 1], [], []>} : vector<16x128xbf16>, vector<128x128xbf16>, vector<16x128xf32> -> vector<16x128xf32>
      %c0_18 = arith.constant 0 : index
      %c0_19 = arith.constant 0 : index
      %27 = vector.load %arg9[%c0_18, %c0_19] : memref<1x128xf32, #tpu.memory_space<vmem>>, vector<1x128xf32>
      %28 = vector.broadcast %27 : vector<1x128xf32> to vector<16x128xf32>
      %29 = arith.addf %26, %28 : vector<16x128xf32>
      %30 = arith.index_cast %1 : i32 to index
      %c0_20 = arith.constant 0 : index
      %31 = vector.load %arg12[%30, %c0_20] : memref<16x128xf32, #tpu.memory_space<vmem>>, vector<16x128xf32>
      tpu.vector_store %arg12[%30, %c0_20], %29 {strides = array<i32>} : memref<16x128xf32, #tpu.memory_space<vmem>>, vector<16x128xf32>,
      %c0_21 = arith.constant 0 : index
      %c0_22 = arith.constant 0 : index
      %32 = vector.load %arg8[%c0_21, %c0_22] : memref<128x128xbf16, #tpu.memory_space<vmem>>, vector<128x128xbf16>
      %cst_23 = arith.constant dense<0.000000e+00> : vector<16x128xf32>
      %33 = tpu.matmul %24, %32, %cst_23 {dimension_numbers = #tpu.dot_dimension_numbers<[1], [0], [0], [1], [0, 0, 1, 1], [], []>} : vector<16x128xbf16>, vector<128x128xbf16>, vector<16x128xf32> -> vector<16x128xf32>
      %34 = arith.truncf %33 : vector<16x128xf32> to vector<16x128xbf16>
      %c0_i32_24 = arith.constant 0 : i32
      %35 = arith.cmpi eq, %arg1, %c0_i32_24 : i32
      %36 = arith.extui %35 : i1 to i32
      %c0_i32_25 = arith.constant 0 : i32
      %37 = arith.cmpi ne, %36, %c0_i32_25 : i32
      scf.if %37 {
        %cst_31 = arith.constant 0.000000e+00 : f32
        %42 = vector.broadcast %cst_31 : f32 to vector<16x128xf32>
        %c0_32 = arith.constant 0 : index
        %c0_33 = arith.constant 0 : index
        %43 = vector.load %arg13[%c0_32, %c0_33] : memref<16x128xf32, #tpu.memory_space<vmem>>, vector<16x128xf32>
        tpu.vector_store %arg13[%c0_32, %c0_33], %42 {strides = array<i32>} : memref<16x128xf32, #tpu.memory_space<vmem>>, vector<16x128xf32>,
      } else {
      }
      %c0_26 = arith.constant 0 : index
      %c0_27 = arith.constant 0 : index
      %38 = vector.load %arg13[%c0_26, %c0_27] : memref<16x128xf32, #tpu.memory_space<vmem>>, vector<16x128xf32>
      %cst_28 = arith.constant dense<0.000000e+00> : vector<16x128xf32>
      %39 = tpu.matmul %8, %34, %cst_28 {dimension_numbers = #tpu.dot_dimension_numbers<[0], [0], [1], [1], [0, 1, 1, 1], [], []>} : vector<16x16xbf16>, vector<16x128xbf16>, vector<16x128xf32> -> vector<16x128xf32>
      %40 = arith.addf %38, %39 : vector<16x128xf32>
      %c0_29 = arith.constant 0 : index
      %c0_30 = arith.constant 0 : index
      %41 = vector.load %arg13[%c0_29, %c0_30] : memref<16x128xf32, #tpu.memory_space<vmem>>, vector<16x128xf32>
      tpu.vector_store %arg13[%c0_29, %c0_30], %40 {strides = array<i32>} : memref<16x128xf32, #tpu.memory_space<vmem>>, vector<16x128xf32>,
    } else {
    }
    %c1_i32 = arith.constant 1 : i32
    %5 = arith.cmpi eq, %arg0, %c1_i32 : i32
    %6 = arith.extui %5 : i1 to i32
    %c0_i32_1 = arith.constant 0 : i32
    %7 = arith.cmpi ne, %6, %c0_i32_1 : i32
    scf.if %7 {
      %8 = arith.index_cast %1 : i32 to index
      %c0 = arith.constant 0 : index
      %9 = vector.load %arg13[%8, %c0] : memref<16x128xf32, #tpu.memory_space<vmem>>, vector<16x128xf32>
      %10 = arith.index_cast %1 : i32 to index
      %c0_2 = arith.constant 0 : index
      %11 = vector.load %arg12[%10, %c0_2] : memref<16x128xf32, #tpu.memory_space<vmem>>, vector<16x128xf32>
      %12 = arith.addf %11, %9 : vector<16x128xf32>
      %c0_3 = arith.constant 0 : index
      %c0_4 = arith.constant 0 : index
      %13 = vector.load %arg10[%c0_3, %c0_4] : memref<1x128xf32, #tpu.memory_space<vmem>>, vector<1x128xf32>
      %14 = vector.broadcast %13 : vector<1x128xf32> to vector<16x128xf32>
      %15 = arith.addf %12, %14 : vector<16x128xf32>
      %cst = arith.constant dense<0xFF800000> : vector<16xf32>
      %16 = vector.multi_reduction <maximumf>, %15, %cst [1] : vector<16x128xf32> to vector<16xf32>
      %17 = vector.shape_cast %16 : vector<16xf32> to vector<16x1xf32>
      %18 = vector.broadcast %17 : vector<16x1xf32> to vector<16x128xf32>
      %19 = arith.subf %15, %18 : vector<16x128xf32>
      %20 = math.exp %19 : vector<16x128xf32>
      %cst_5 = arith.constant dense<0.000000e+00> : vector<16xf32>
      %21 = vector.multi_reduction <add>, %20, %cst_5 [1] : vector<16x128xf32> to vector<16xf32>
      %22 = vector.shape_cast %21 : vector<16xf32> to vector<16x1xf32>
      %23 = math.log %22 : vector<16x1xf32>
      %24 = arith.addf %17, %23 : vector<16x1xf32>
      %25 = vector.broadcast %24 : vector<16x1xf32> to vector<16x128xf32>
      %26 = arith.subf %15, %25 : vector<16x128xf32>
      %c0_6 = arith.constant 0 : index
      %c0_7 = arith.constant 0 : index
      %27 = vector.load %arg11[%c0_6, %c0_7] : memref<16x128xf32, #tpu.memory_space<vmem>>, vector<16x128xf32>
      tpu.vector_store %arg11[%c0_6, %c0_7], %26 {strides = array<i32>} : memref<16x128xf32, #tpu.memory_space<vmem>>, vector<16x128xf32>,
    } else {
    }
    return
  }
  func.func @transform_0(%arg0: i32, %arg1: i32) -> (i32, i32) {
    %c1_i32 = arith.constant 1 : i32
    %0 = arith.subi %c1_i32, %arg0 : i32
    %1 = arith.muli %arg1, %0 : i32
    %c0_i32 = arith.constant 0 : i32
    %2 = arith.muli %c0_i32, %arg0 : i32
    %3 = arith.addi %1, %2 : i32
    %c0_i32_0 = arith.constant 0 : i32
    %c0_i32_1 = arith.constant 0 : i32
    return %3, %c0_i32_0 : i32, i32
  }
  func.func @transform_1(%arg0: i32, %arg1: i32) -> (i32, i32) {
    %c0_i32 = arith.constant 0 : i32
    %c0_i32_0 = arith.constant 0 : i32
    %c0_i32_1 = arith.constant 0 : i32
    return %c0_i32, %c0_i32_0 : i32, i32
  }
  func.func @transform_2(%arg0: i32, %arg1: i32) -> (i32, i32) {
    %c0_i32 = arith.constant 0 : i32
    %c0_i32_0 = arith.constant 0 : i32
    %c0_i32_1 = arith.constant 0 : i32
    return %c0_i32, %c0_i32_0 : i32, i32
  }
  func.func @transform_3(%arg0: i32, %arg1: i32) -> (i32, i32) {
    %c0_i32 = arith.constant 0 : i32
    %c0_i32_0 = arith.constant 0 : i32
    %c0_i32_1 = arith.constant 0 : i32
    return %c0_i32, %c0_i32_0 : i32, i32
  }
  func.func @transform_4(%arg0: i32, %arg1: i32) -> (i32, i32) {
    %c0_i32 = arith.constant 0 : i32
    %c0_i32_0 = arith.constant 0 : i32
    %c0_i32_1 = arith.constant 0 : i32
    return %c0_i32, %c0_i32_0 : i32, i32
  }
  func.func @transform_5(%arg0: i32, %arg1: i32) -> (i32, i32) {
    %c0_i32 = arith.constant 0 : i32
    %c0_i32_0 = arith.constant 0 : i32
    %c0_i32_1 = arith.constant 0 : i32
    return %c0_i32, %c0_i32_0 : i32, i32
  }
  func.func @transform_6(%arg0: i32, %arg1: i32) -> (i32, i32) {
    %c0_i32 = arith.constant 0 : i32
    %c0_i32_0 = arith.constant 0 : i32
    %c0_i32_1 = arith.constant 0 : i32
    return %c0_i32, %c0_i32_0 : i32, i32
  }
  func.func @transform_7(%arg0: i32, %arg1: i32) -> (i32, i32) {
    %c0_i32 = arith.constant 0 : i32
    %c0_i32_0 = arith.constant 0 : i32
    %c0_i32_1 = arith.constant 0 : i32
    return %c0_i32, %c0_i32_0 : i32, i32
  }
  func.func @transform_8(%arg0: i32, %arg1: i32) -> (i32, i32) {
    %c0_i32 = arith.constant 0 : i32
    %c0_i32_0 = arith.constant 0 : i32
    %c0_i32_1 = arith.constant 0 : i32
    return %c0_i32, %c0_i32_0 : i32, i32
  }
  func.func @transform_9(%arg0: i32, %arg1: i32) -> (i32, i32) {
    %0 = arith.muli %arg1, %arg0 : i32
    %c0_i32 = arith.constant 0 : i32
    %c0_i32_0 = arith.constant 0 : i32
    return %0, %c0_i32 : i32, i32
  }
}

module attributes {stable_mosaic.version = 11 : i64} {
  func.func @chebnet_kernel(%arg0: i32, %arg1: i32, %arg2: memref<16x16xbf16, #tpu.memory_space<vmem>>, %arg3: memref<16x128xbf16, #tpu.memory_space<vmem>>, %arg4: memref<128x128xbf16, #tpu.memory_space<vmem>>, %arg5: memref<128x128xbf16, #tpu.memory_space<vmem>>, %arg6: memref<1x128xf32, #tpu.memory_space<vmem>>, %arg7: memref<128x128xbf16, #tpu.memory_space<vmem>>, %arg8: memref<128x128xbf16, #tpu.memory_space<vmem>>, %arg9: memref<1x128xf32, #tpu.memory_space<vmem>>, %arg10: memref<1x128xf32, #tpu.memory_space<vmem>>, %arg11: memref<16x128xf32, #tpu.memory_space<vmem>>, %arg12: memref<16x128xf32, #tpu.memory_space<vmem>>, %arg13: memref<16x128xf32, #tpu.memory_space<vmem>>) attributes {dimension_semantics = [#tpu.dimension_semantics<arbitrary>, #tpu.dimension_semantics<arbitrary>], iteration_bounds = array<i64: 2, 1>, scalar_prefetch = 0 : i64, scratch_operands = 2 : i64, tpu.core_type = #tpu.core_type<tc>, window_params = [{transform_indices = @transform_0, window_bounds = array<i64: 16, 16>}, {pipeline_mode = #tpu.pipeline_mode<synchronous>, transform_indices = @transform_1, window_bounds = array<i64: 16, 128>}, {pipeline_mode = #tpu.pipeline_mode<synchronous>, transform_indices = @transform_2, window_bounds = array<i64: 128, 128>}, {pipeline_mode = #tpu.pipeline_mode<synchronous>, transform_indices = @transform_3, window_bounds = array<i64: 128, 128>}, {pipeline_mode = #tpu.pipeline_mode<synchronous>, transform_indices = @transform_4, window_bounds = array<i64: 1, 128>}, {pipeline_mode = #tpu.pipeline_mode<synchronous>, transform_indices = @transform_5, window_bounds = array<i64: 128, 128>}, {pipeline_mode = #tpu.pipeline_mode<synchronous>, transform_indices = @transform_6, window_bounds = array<i64: 128, 128>}, {pipeline_mode = #tpu.pipeline_mode<synchronous>, transform_indices = @transform_7, window_bounds = array<i64: 1, 128>}, {pipeline_mode = #tpu.pipeline_mode<synchronous>, transform_indices = @transform_8, window_bounds = array<i64: 1, 128>}, {transform_indices = @transform_9, window_bounds = array<i64: 16, 128>}]} {
    %c16_i32 = arith.constant 16 : i32
    %0 = arith.muli %arg1, %c16_i32 : i32
    %1 = tpu.assume_multiple %0, 16 : i32
    %c0_i32 = arith.constant 0 : i32
    %2 = arith.cmpi eq, %arg0, %c0_i32 : i32
    %3 = arith.extui %2 : i1 to i32
    %c0_i32_0 = arith.constant 0 : i32
    %4 = arith.cmpi ne, %3, %c0_i32_0 : i32
    scf.if %4 {
      %c0 = arith.constant 0 : index
      %c0_2 = arith.constant 0 : index
      %8 = vector.load %arg2[%c0, %c0_2] : memref<16x16xbf16, #tpu.memory_space<vmem>>, vector<16x16xbf16>
      %c0_3 = arith.constant 0 : index
      %c0_4 = arith.constant 0 : index
      %9 = vector.load %arg3[%c0_3, %c0_4] : memref<16x128xbf16, #tpu.memory_space<vmem>>, vector<16x128xbf16>
      %10 = arith.index_cast %1 : i32 to index
      %c0_5 = arith.constant 0 : index
      %11 = vector.load %arg3[%10, %c0_5] : memref<16x128xbf16, #tpu.memory_space<vmem>>, vector<16x128xbf16>
      %cst = arith.constant dense<0.000000e+00> : vector<16x128xf32>
      %12 = tpu.matmul %8, %9, %cst {dimension_numbers = #tpu.dot_dimension_numbers<[1], [0], [0], [1], [0, 0, 1, 1], [], []>} : vector<16x16xbf16>, vector<16x128xbf16>, vector<16x128xf32> -> vector<16x128xf32>
      %c0_6 = arith.constant 0 : index
      %c0_7 = arith.constant 0 : index
      %13 = vector.load %arg4[%c0_6, %c0_7] : memref<128x128xbf16, #tpu.memory_space<vmem>>, vector<128x128xbf16>
      %cst_8 = arith.constant dense<0.000000e+00> : vector<16x128xf32>
      %14 = tpu.matmul %11, %13, %cst_8 {dimension_numbers = #tpu.dot_dimension_numbers<[1], [0], [0], [1], [0, 0, 1, 1], [], []>} : vector<16x128xbf16>, vector<128x128xbf16>, vector<16x128xf32> -> vector<16x128xf32>
      %15 = arith.truncf %12 : vector<16x128xf32> to vector<16x128xbf16>
      %c0_9 = arith.constant 0 : index
      %c0_10 = arith.constant 0 : index
      %16 = vector.load %arg5[%c0_9, %c0_10] : memref<128x128xbf16, #tpu.memory_space<vmem>>, vector<128x128xbf16>
      %cst_11 = arith.constant dense<0.000000e+00> : vector<16x128xf32>
      %17 = tpu.matmul %15, %16, %cst_11 {dimension_numbers = #tpu.dot_dimension_numbers<[1], [0], [0], [1], [0, 0, 1, 1], [], []>} : vector<16x128xbf16>, vector<128x128xbf16>, vector<16x128xf32> -> vector<16x128xf32>
      %18 = arith.addf %14, %17 : vector<16x128xf32>
      %c0_12 = arith.constant 0 : index
      %c0_13 = arith.constant 0 : index
      %19 = vector.load %arg6[%c0_12, %c0_13] : memref<1x128xf32, #tpu.memory_space<vmem>>, vector<1x128xf32>
      %20 = vector.broadcast %19 : vector<1x128xf32> to vector<16x128xf32>
      %21 = arith.addf %18, %20 : vector<16x128xf32>
      %cst_14 = arith.constant 0.000000e+00 : f32
      %22 = vector.broadcast %cst_14 : f32 to vector<16x128xf32>
      %23 = arith.maximumf %21, %22 : vector<16x128xf32>
      %24 = arith.truncf %23 : vector<16x128xf32> to vector<16x128xbf16>
      %c0_15 = arith.constant 0 : index
      %c0_16 = arith.constant 0 : index
      %25 = vector.load %arg7[%c0_15, %c0_16] : memref<128x128xbf16, #tpu.memory_space<vmem>>, vector<128x128xbf16>
      %cst_17 = arith.constant dense<0.000000e+00> : vector<16x128xf32>
      %26 = tpu.matmul %24, %25, %cst_17 {dimension_numbers = #tpu.dot_dimension_numbers<[1], [0], [0], [1], [0, 0, 1, 1], [], []>} : vector<16x128xbf16>, vector<128x128xbf16>, vector<16x128xf32> -> vector<16x128xf32>
      %c0_18 = arith.constant 0 : index
      %c0_19 = arith.constant 0 : index
      %27 = vector.load %arg9[%c0_18, %c0_19] : memref<1x128xf32, #tpu.memory_space<vmem>>, vector<1x128xf32>
      %28 = vector.broadcast %27 : vector<1x128xf32> to vector<16x128xf32>
      %29 = arith.addf %26, %28 : vector<16x128xf32>
      %30 = arith.index_cast %1 : i32 to index
      %c0_20 = arith.constant 0 : index
      %31 = vector.load %arg12[%30, %c0_20] : memref<16x128xf32, #tpu.memory_space<vmem>>, vector<16x128xf32>
      tpu.vector_store %arg12[%30, %c0_20], %29 {strides = array<i32>} : memref<16x128xf32, #tpu.memory_space<vmem>>, vector<16x128xf32>,
      %c0_21 = arith.constant 0 : index
      %c0_22 = arith.constant 0 : index
      %32 = vector.load %arg8[%c0_21, %c0_22] : memref<128x128xbf16, #tpu.memory_space<vmem>>, vector<128x128xbf16>
      %cst_23 = arith.constant dense<0.000000e+00> : vector<16x128xf32>
      %33 = tpu.matmul %24, %32, %cst_23 {dimension_numbers = #tpu.dot_dimension_numbers<[1], [0], [0], [1], [0, 0, 1, 1], [], []>} : vector<16x128xbf16>, vector<128x128xbf16>, vector<16x128xf32> -> vector<16x128xf32>
      %34 = arith.truncf %33 : vector<16x128xf32> to vector<16x128xbf16>
      %c0_i32_24 = arith.constant 0 : i32
      %35 = arith.cmpi eq, %arg1, %c0_i32_24 : i32
      %36 = arith.extui %35 : i1 to i32
      %c0_i32_25 = arith.constant 0 : i32
      %37 = arith.cmpi ne, %36, %c0_i32_25 : i32
      scf.if %37 {
        %cst_31 = arith.constant 0.000000e+00 : f32
        %42 = vector.broadcast %cst_31 : f32 to vector<16x128xf32>
        %c0_32 = arith.constant 0 : index
        %c0_33 = arith.constant 0 : index
        %43 = vector.load %arg13[%c0_32, %c0_33] : memref<16x128xf32, #tpu.memory_space<vmem>>, vector<16x128xf32>
        tpu.vector_store %arg13[%c0_32, %c0_33], %42 {strides = array<i32>} : memref<16x128xf32, #tpu.memory_space<vmem>>, vector<16x128xf32>,
      } else {
      }
      %c0_26 = arith.constant 0 : index
      %c0_27 = arith.constant 0 : index
      %38 = vector.load %arg13[%c0_26, %c0_27] : memref<16x128xf32, #tpu.memory_space<vmem>>, vector<16x128xf32>
      %cst_28 = arith.constant dense<0.000000e+00> : vector<16x128xf32>
      %39 = tpu.matmul %8, %34, %cst_28 {dimension_numbers = #tpu.dot_dimension_numbers<[0], [0], [1], [1], [0, 1, 1, 1], [], []>} : vector<16x16xbf16>, vector<16x128xbf16>, vector<16x128xf32> -> vector<16x128xf32>
      %40 = arith.addf %38, %39 : vector<16x128xf32>
      %c0_29 = arith.constant 0 : index
      %c0_30 = arith.constant 0 : index
      %41 = vector.load %arg13[%c0_29, %c0_30] : memref<16x128xf32, #tpu.memory_space<vmem>>, vector<16x128xf32>
      tpu.vector_store %arg13[%c0_29, %c0_30], %40 {strides = array<i32>} : memref<16x128xf32, #tpu.memory_space<vmem>>, vector<16x128xf32>,
    } else {
    }
    %c1_i32 = arith.constant 1 : i32
    %5 = arith.cmpi eq, %arg0, %c1_i32 : i32
    %6 = arith.extui %5 : i1 to i32
    %c0_i32_1 = arith.constant 0 : i32
    %7 = arith.cmpi ne, %6, %c0_i32_1 : i32
    scf.if %7 {
      %8 = arith.index_cast %1 : i32 to index
      %c0 = arith.constant 0 : index
      %9 = vector.load %arg13[%8, %c0] : memref<16x128xf32, #tpu.memory_space<vmem>>, vector<16x128xf32>
      %10 = arith.index_cast %1 : i32 to index
      %c0_2 = arith.constant 0 : index
      %11 = vector.load %arg12[%10, %c0_2] : memref<16x128xf32, #tpu.memory_space<vmem>>, vector<16x128xf32>
      %12 = arith.addf %11, %9 : vector<16x128xf32>
      %c0_3 = arith.constant 0 : index
      %c0_4 = arith.constant 0 : index
      %13 = vector.load %arg10[%c0_3, %c0_4] : memref<1x128xf32, #tpu.memory_space<vmem>>, vector<1x128xf32>
      %14 = vector.broadcast %13 : vector<1x128xf32> to vector<16x128xf32>
      %15 = arith.addf %12, %14 : vector<16x128xf32>
      %cst = arith.constant dense<0xFF800000> : vector<16xf32>
      %16 = vector.multi_reduction <maximumf>, %15, %cst [1] : vector<16x128xf32> to vector<16xf32>
      %17 = vector.shape_cast %16 : vector<16xf32> to vector<16x1xf32>
      %18 = vector.broadcast %17 : vector<16x1xf32> to vector<16x128xf32>
      %19 = arith.subf %15, %18 : vector<16x128xf32>
      %20 = math.exp %19 : vector<16x128xf32>
      %cst_5 = arith.constant dense<0.000000e+00> : vector<16xf32>
      %21 = vector.multi_reduction <add>, %20, %cst_5 [1] : vector<16x128xf32> to vector<16xf32>
      %22 = vector.shape_cast %21 : vector<16xf32> to vector<16x1xf32>
      %23 = math.log %22 : vector<16x1xf32>
      %24 = arith.addf %17, %23 : vector<16x1xf32>
      %25 = vector.broadcast %24 : vector<16x1xf32> to vector<16x128xf32>
      %26 = arith.subf %15, %25 : vector<16x128xf32>
      %c0_6 = arith.constant 0 : index
      %c0_7 = arith.constant 0 : index
      %27 = vector.load %arg11[%c0_6, %c0_7] : memref<16x128xf32, #tpu.memory_space<vmem>>, vector<16x128xf32>
      tpu.vector_store %arg11[%c0_6, %c0_7], %26 {strides = array<i32>} : memref<16x128xf32, #tpu.memory_space<vmem>>, vector<16x128xf32>,
    } else {
    }
    return
  }
  func.func @transform_0(%arg0: i32, %arg1: i32) -> (i32, i32) {
    %c1_i32 = arith.constant 1 : i32
    %0 = arith.subi %c1_i32, %arg0 : i32
    %1 = arith.muli %arg1, %0 : i32
    %c0_i32 = arith.constant 0 : i32
    %2 = arith.muli %c0_i32, %arg0 : i32
    %3 = arith.addi %1, %2 : i32
    %c0_i32_0 = arith.constant 0 : i32
    %c0_i32_1 = arith.constant 0 : i32
    return %3, %c0_i32_0 : i32, i32
  }
  func.func @transform_1(%arg0: i32, %arg1: i32) -> (i32, i32) {
    %c0_i32 = arith.constant 0 : i32
    %c0_i32_0 = arith.constant 0 : i32
    %c0_i32_1 = arith.constant 0 : i32
    return %c0_i32, %c0_i32_0 : i32, i32
  }
  func.func @transform_2(%arg0: i32, %arg1: i32) -> (i32, i32) {
    %c0_i32 = arith.constant 0 : i32
    %c0_i32_0 = arith.constant 0 : i32
    %c0_i32_1 = arith.constant 0 : i32
    return %c0_i32, %c0_i32_0 : i32, i32
  }
  func.func @transform_3(%arg0: i32, %arg1: i32) -> (i32, i32) {
    %c0_i32 = arith.constant 0 : i32
    %c0_i32_0 = arith.constant 0 : i32
    %c0_i32_1 = arith.constant 0 : i32
    return %c0_i32, %c0_i32_0 : i32, i32
  }
  func.func @transform_4(%arg0: i32, %arg1: i32) -> (i32, i32) {
    %c0_i32 = arith.constant 0 : i32
    %c0_i32_0 = arith.constant 0 : i32
    %c0_i32_1 = arith.constant 0 : i32
    return %c0_i32, %c0_i32_0 : i32, i32
  }
  func.func @transform_5(%arg0: i32, %arg1: i32) -> (i32, i32) {
    %c0_i32 = arith.constant 0 : i32
    %c0_i32_0 = arith.constant 0 : i32
    %c0_i32_1 = arith.constant 0 : i32
    return %c0_i32, %c0_i32_0 : i32, i32
  }
  func.func @transform_6(%arg0: i32, %arg1: i32) -> (i32, i32) {
    %c0_i32 = arith.constant 0 : i32
    %c0_i32_0 = arith.constant 0 : i32
    %c0_i32_1 = arith.constant 0 : i32
    return %c0_i32, %c0_i32_0 : i32, i32
  }
  func.func @transform_7(%arg0: i32, %arg1: i32) -> (i32, i32) {
    %c0_i32 = arith.constant 0 : i32
    %c0_i32_0 = arith.constant 0 : i32
    %c0_i32_1 = arith.constant 0 : i32
    return %c0_i32, %c0_i32_0 : i32, i32
  }
  func.func @transform_8(%arg0: i32, %arg1: i32) -> (i32, i32) {
    %c0_i32 = arith.constant 0 : i32
    %c0_i32_0 = arith.constant 0 : i32
    %c0_i32_1 = arith.constant 0 : i32
    return %c0_i32, %c0_i32_0 : i32, i32
  }
  func.func @transform_9(%arg0: i32, %arg1: i32) -> (i32, i32) {
    %0 = arith.muli %arg1, %arg0 : i32
    %c0_i32 = arith.constant 0 : i32
    %c0_i32_0 = arith.constant 0 : i32
    return %0, %c0_i32 : i32, i32
  }
}

</mosaic_0001>

<llo_original>
// kernel: tpu_custom_call.1
$region0: #{tpu_custom_call.1}
  #allocation0 [shape = 'u32[]', space=smem, size = 0x4, offset = 0x4, fixed_abs, tag = 'smem constant byte address 0x4 - core index']
  #allocation1 [shape = 'u32[72,128]{1,0:T(1,128)}', space=vmem, size = 0x9000, scoped, tag = 'internal scratch']
  #allocation2 [shape = 'f32[16,128]{1,0:T(8,128)}', space=vmem, size = 0x2000, scoped, tag = 'scratch operand']
  #allocation3 [shape = 'f32[16,128]{1,0:T(8,128)}', space=vmem, size = 0x2000, scoped, tag = 'scratch operand']
  %s0 = inlined_call_operand.hbm [shape: bf16[16,16], index: 0, kind: input, shape index: {}]
  %s1 = inlined_call_operand.hbm [shape: bf16[16,128], index: 1, kind: input, shape index: {}]
  %s2 = inlined_call_operand.hbm [shape: bf16[128,128], index: 2, kind: input, shape index: {}]
  %s3 = inlined_call_operand.hbm [shape: bf16[128,128], index: 3, kind: input, shape index: {}]
  %s4 = inlined_call_operand.vmem [shape: f32[1,128], index: 4, kind: input, shape index: {}]
  %s5 = inlined_call_operand.hbm [shape: bf16[128,128], index: 5, kind: input, shape index: {}]
  %s6 = inlined_call_operand.hbm [shape: bf16[128,128], index: 6, kind: input, shape index: {}]
  %s7 = inlined_call_operand.vmem [shape: f32[1,128], index: 7, kind: input, shape index: {}]
  %s8 = inlined_call_operand.vmem [shape: f32[1,128], index: 8, kind: input, shape index: {}]
  %s9 = inlined_call_operand.hbm [shape: f32[16,128], index: 9, kind: output, shape index: {}]
  %s10 = sld [smem:[#allocation0]]
  $region105: #{tpu_custom_call.1} parent=0
    _
  %s12 = ssub.s32 1, %s10
  %s13 = scalar_select 0, %s12, %s10
  $region1: #{tpu_custom_call.1} parent=0
    #allocation4 [shape = 'u8[8192]{0}', space=vmem, size = 0x2000, scoped, tag = 'input window, operand 0']
    #allocation5 [shape = 's32[2]{0}', space=sflag, size = 0x8, scoped, tag = 'scoped memory for tpu_custom_call.1']
    #allocation6 [shape = 's32[2]{0}', space=sflag, size = 0x8, scoped, tag = 'scoped memory for tpu_custom_call.1']
    #allocation7 [shape = 'u8[4096]{0}', space=vmem, size = 0x1000, scoped, tag = 'input window, operand 1, single buffered']
    #allocation8 [shape = 's32[1]{0}', space=sflag, size = 0x4, scoped, tag = 'scoped memory for tpu_custom_call.1']
    #allocation9 [shape = 'u8[32768]{0}', space=vmem, size = 0x8000, scoped, tag = 'input window, operand 2, single buffered']
    #allocation10 [shape = 'u8[32768]{0}', space=vmem, size = 0x8000, scoped, tag = 'input window, operand 3, single buffered']
    #allocation11 [shape = 's32[1]{0}', space=sflag, size = 0x4, scoped, tag = 'scoped memory for tpu_custom_call.1']
    #allocation12 [shape = 'u8[32768]{0}', space=vmem, size = 0x8000, scoped, tag = 'input window, operand 5, single buffered']
    #allocation13 [shape = 'u8[32768]{0}', space=vmem, size = 0x8000, scoped, tag = 'input window, operand 6, single buffered']
    #allocation14 [shape = 's32[1]{0}', space=sflag, size = 0x4, scoped, tag = 'scoped memory for tpu_custom_call.1']
    #allocation15 [shape = 'u8[16384]{0}', space=vmem, size = 0x4000, scoped, tag = 'output window, operand 0']
    %14 = vsyncpa [#allocation5], 0
    %s15 = scalar_lea.sflag [#allocation5], 1
    %16 = vsyncpa %s15, 0
    %17 = vsyncpa [#allocation8], 0
    %18 = vsyncpa [#allocation11], 0
    %19 = vsyncpa [#allocation14], 0
    %20 = vsyncpa [#allocation6], 0
    %s21 = scalar_lea.sflag [#allocation6], 1
    %22 = vsyncpa %s21, 0
    loop: start=0, step=1, limit=4
    $region2: #{tpu_custom_call.1} parent=1 // loop_pre_header
      _
    $region3: #{tpu_custom_call.1} parent=1 // loop_header
      %s24 = sphi 0, %s28
      %p25 = scmp.ge.s32.totalorder %s24, 4
      %s31 = sphi 0, %s43
      %s32 = sphi 0, %s39
      %s33 = sphi 0, %s31
      %s34 = sphi 0, %s32
      %s35 = sphi 0, %s33
      %s36 = sphi 0, %s34
      %s50 = sphi 0, %s52
      %s53 = sphi 0, %s50
      %s54 = sphi 0, %s53
      %s70 = sphi 0, %s54
      %s74 = sphi 0, %s74
      %s76 = sphi 0, %s74
      %s77 = sphi 0, %s76
      %s91 = sphi 0, %s77
      %s95 = sphi 0, %s95
      %s97 = sphi 0, %s95
      %s98 = sphi 0, %s97
      %s112 = sphi 0, %s98
      %s116 = sphi 0, %s116
      %s118 = sphi 0, %s116
      %s119 = sphi 0, %s118
      %s133 = sphi 0, %s119
      %s137 = sphi 0, %s137
      %s139 = sphi 0, %s137
      %s140 = sphi 0, %s139
      %s154 = sphi 0, %s140
      %s158 = sphi 0, %s158
      %s160 = sphi 0, %s158
      %s161 = sphi 0, %s160
      %s175 = sphi 0, %s161
      %s179 = sphi 0, %s179
      %s181 = sphi 0, %s179
      %s182 = sphi 0, %s181
      %s196 = sphi 0, %s182
      %s200 = sphi 0, %s200
      %s202 = sphi 0, %s200
      %s203 = sphi 0, %s202
      %s217 = sphi 0, %s203
      %s221 = sphi 0, %s221
      %s223 = sphi 0, %s221
      %s224 = sphi 0, %s223
      %s238 = sphi 0, %s224
      %s246 = sphi 0, %s248
      %s249 = sphi 0, %s246
      %s250 = sphi 0, %s249
      %s266 = sphi 0, %s250
    $region4: #{tpu_custom_call.1} parent=1 // loop_header_branch
      %27 = sbr.rel (%p25) target = $region8
    $region5: #{tpu_custom_call.1} parent=1 // loop_body
      %s29 = ssub.s32 %s24, 1
      %s30 = ssub.s32 %s24, 2
      %s37 = sadd.s32 1, %s32
      %p38 = scmp.ge.s32.totalorder %s37, 1
      %s39 = scalar_select %p38, 0, %s37
      %s40 = sadd.s32 1, %s31
      %s41 = scalar_select %p38, %s40, %s31
      %p42 = scmp.ge.s32.totalorder %s41, 2
      %s43 = scalar_select %p42, 0, %s41
      %s44 = ssub.s32 1, %s31
      %s45 = smul.u32 %s32, %s44
      %s46 = ssub.s32 1, %s43
      %s47 = smul.u32 %s39, %s46
      %s48 = ssub.s32 %s45, %s47
      %p49 = scmp.eq.s32.totalorder %s48, 0
      %s51 = sadd.s32 %s50, 1
      %s52 = scalar_select %p49, %s50, %s51
      %p55 = pneg %p49
      %p56 = scmp.eq.s32.totalorder %s24, 1
      %p57 = por %p55, %p56
      %p58 = scmp.ne.s32.totalorder %s50, %s53
      %p59 = scmp.eq.s32.totalorder %s24, 0
      %p60 = por %p58, %p59
      %p61 = scmp.ne.s32.totalorder %s50, %s53
      %p62 = scmp.eq.s32.totalorder %s29, 1
      %p63 = por %p61, %p62
      %p64 = scmp.ne.s32.totalorder %s53, %s54
      %p65 = scmp.eq.s32.totalorder %s29, 0
      %p66 = por %p64, %p65
      %p67 = scmp.ne.s32.totalorder %s53, %s54
      %p68 = scmp.eq.s32.totalorder %s30, 1
      %p69 = por %p67, %p68
      %p71 = scmp.ne.s32.totalorder %s54, %s70
      %p72 = scmp.eq.s32.totalorder %s30, 0
      %p73 = por %p71, %p72
      %s75 = sadd.s32 %s74, 1
      %p78 = scmp.eq.s32.totalorder %s24, 1
      %p79 = scmp.ne.s32.totalorder %s74, %s76
      %p80 = scmp.eq.s32.totalorder %s24, 0
      %p81 = por %p79, %p80
      %p82 = scmp.ne.s32.totalorder %s74, %s76
      %p83 = scmp.eq.s32.totalorder %s29, 1
      %p84 = por %p82, %p83
      %p85 = scmp.ne.s32.totalorder %s76, %s77
      %p86 = scmp.eq.s32.totalorder %s29, 0
      %p87 = por %p85, %p86
      %p88 = scmp.ne.s32.totalorder %s76, %s77
      %p89 = scmp.eq.s32.totalorder %s30, 1
      %p90 = por %p88, %p89
      %p92 = scmp.ne.s32.totalorder %s77, %s91
      %p93 = scmp.eq.s32.totalorder %s30, 0
      %p94 = por %p92, %p93
      %s96 = sadd.s32 %s95, 1
      %p99 = scmp.eq.s32.totalorder %s24, 1
      %p100 = scmp.ne.s32.totalorder %s95, %s97
      %p101 = scmp.eq.s32.totalorder %s24, 0
      %p102 = por %p100, %p101
      %p103 = scmp.ne.s32.totalorder %s95, %s97
      %p104 = scmp.eq.s32.totalorder %s29, 1
      %p105 = por %p103, %p104
      %p106 = scmp.ne.s32.totalorder %s97, %s98
      %p107 = scmp.eq.s32.totalorder %s29, 0
      %p108 = por %p106, %p107
      %p109 = scmp.ne.s32.totalorder %s97, %s98
      %p110 = scmp.eq.s32.totalorder %s30, 1
      %p111 = por %p109, %p110
      %p113 = scmp.ne.s32.totalorder %s98, %s112
      %p114 = scmp.eq.s32.totalorder %s30, 0
      %p115 = por %p113, %p114
      %s117 = sadd.s32 %s116, 1
      %p120 = scmp.eq.s32.totalorder %s24, 1
      %p121 = scmp.ne.s32.totalorder %s116, %s118
      %p122 = scmp.eq.s32.totalorder %s24, 0
      %p123 = por %p121, %p122
      %p124 = scmp.ne.s32.totalorder %s116, %s118
      %p125 = scmp.eq.s32.totalorder %s29, 1
      %p126 = por %p124, %p125
      %p127 = scmp.ne.s32.totalorder %s118, %s119
      %p128 = scmp.eq.s32.totalorder %s29, 0
      %p129 = por %p127, %p128
      %p130 = scmp.ne.s32.totalorder %s118, %s119
      %p131 = scmp.eq.s32.totalorder %s30, 1
      %p132 = por %p130, %p131
      %p134 = scmp.ne.s32.totalorder %s119, %s133
      %p135 = scmp.eq.s32.totalorder %s30, 0
      %p136 = por %p134, %p135
      %s138 = sadd.s32 %s137, 1
      %p141 = scmp.eq.s32.totalorder %s24, 1
      %p142 = scmp.ne.s32.totalorder %s137, %s139
      %p143 = scmp.eq.s32.totalorder %s24, 0
      %p144 = por %p142, %p143
      %p145 = scmp.ne.s32.totalorder %s137, %s139
      %p146 = scmp.eq.s32.totalorder %s29, 1
      %p147 = por %p145, %p146
      %p148 = scmp.ne.s32.totalorder %s139, %s140
      %p149 = scmp.eq.s32.totalorder %s29, 0
      %p150 = por %p148, %p149
      %p151 = scmp.ne.s32.totalorder %s139, %s140
      %p152 = scmp.eq.s32.totalorder %s30, 1
      %p153 = por %p151, %p152
      %p155 = scmp.ne.s32.totalorder %s140, %s154
      %p156 = scmp.eq.s32.totalorder %s30, 0
      %p157 = por %p155, %p156
      %s159 = sadd.s32 %s158, 1
      %p162 = scmp.eq.s32.totalorder %s24, 1
      %p163 = scmp.ne.s32.totalorder %s158, %s160
      %p164 = scmp.eq.s32.totalorder %s24, 0
      %p165 = por %p163, %p164
      %p166 = scmp.ne.s32.totalorder %s158, %s160
      %p167 = scmp.eq.s32.totalorder %s29, 1
      %p168 = por %p166, %p167
      %p169 = scmp.ne.s32.totalorder %s160, %s161
      %p170 = scmp.eq.s32.totalorder %s29, 0
      %p171 = por %p169, %p170
      %p172 = scmp.ne.s32.totalorder %s160, %s161
      %p173 = scmp.eq.s32.totalorder %s30, 1
      %p174 = por %p172, %p173
      %p176 = scmp.ne.s32.totalorder %s161, %s175
      %p177 = scmp.eq.s32.totalorder %s30, 0
      %p178 = por %p176, %p177
      %s180 = sadd.s32 %s179, 1
      %p183 = scmp.eq.s32.totalorder %s24, 1
      %p184 = scmp.ne.s32.totalorder %s179, %s181
      %p185 = scmp.eq.s32.totalorder %s24, 0
      %p186 = por %p184, %p185
      %p187 = scmp.ne.s32.totalorder %s179, %s181
      %p188 = scmp.eq.s32.totalorder %s29, 1
      %p189 = por %p187, %p188
      %p190 = scmp.ne.s32.totalorder %s181, %s182
      %p191 = scmp.eq.s32.totalorder %s29, 0
      %p192 = por %p190, %p191
      %p193 = scmp.ne.s32.totalorder %s181, %s182
      %p194 = scmp.eq.s32.totalorder %s30, 1
      %p195 = por %p193, %p194
      %p197 = scmp.ne.s32.totalorder %s182, %s196
      %p198 = scmp.eq.s32.totalorder %s30, 0
      %p199 = por %p197, %p198
      %s201 = sadd.s32 %s200, 1
      %p204 = scmp.eq.s32.totalorder %s24, 1
      %p205 = scmp.ne.s32.totalorder %s200, %s202
      %p206 = scmp.eq.s32.totalorder %s24, 0
      %p207 = por %p205, %p206
      %p208 = scmp.ne.s32.totalorder %s200, %s202
      %p209 = scmp.eq.s32.totalorder %s29, 1
      %p210 = por %p208, %p209
      %p211 = scmp.ne.s32.totalorder %s202, %s203
      %p212 = scmp.eq.s32.totalorder %s29, 0
      %p213 = por %p211, %p212
      %p214 = scmp.ne.s32.totalorder %s202, %s203
      %p215 = scmp.eq.s32.totalorder %s30, 1
      %p216 = por %p214, %p215
      %p218 = scmp.ne.s32.totalorder %s203, %s217
      %p219 = scmp.eq.s32.totalorder %s30, 0
      %p220 = por %p218, %p219
      %s222 = sadd.s32 %s221, 1
      %p225 = scmp.eq.s32.totalorder %s24, 1
      %p226 = scmp.ne.s32.totalorder %s221, %s223
      %p227 = scmp.eq.s32.totalorder %s24, 0
      %p228 = por %p226, %p227
      %p229 = scmp.ne.s32.totalorder %s221, %s223
      %p230 = scmp.eq.s32.totalorder %s29, 1
      %p231 = por %p229, %p230
      %p232 = scmp.ne.s32.totalorder %s223, %s224
      %p233 = scmp.eq.s32.totalorder %s29, 0
      %p234 = por %p232, %p233
      %p235 = scmp.ne.s32.totalorder %s223, %s224
      %p236 = scmp.eq.s32.totalorder %s30, 1
      %p237 = por %p235, %p236
      %p239 = scmp.ne.s32.totalorder %s224, %s238
      %p240 = scmp.eq.s32.totalorder %s30, 0
      %p241 = por %p239, %p240
      %s242 = smul.u32 %s32, %s31
      %s243 = smul.u32 %s39, %s43
      %s244 = ssub.s32 %s242, %s243
      %p245 = scmp.eq.s32.totalorder %s244, 0
      %s247 = sadd.s32 %s246, 1
      %s248 = scalar_select %p245, %s246, %s247
      %p251 = pneg %p245
      %p252 = scmp.eq.s32.totalorder %s24, 1
      %p253 = por %p251, %p252
      %p254 = scmp.ne.s32.totalorder %s246, %s249
      %p255 = scmp.eq.s32.totalorder %s24, 0
      %p256 = por %p254, %p255
      %p257 = scmp.ne.s32.totalorder %s246, %s249
      %p258 = scmp.eq.s32.totalorder %s29, 1
      %p259 = por %p257, %p258
      %p260 = scmp.ne.s32.totalorder %s249, %s250
      %p261 = scmp.eq.s32.totalorder %s29, 0
      %p262 = por %p260, %p261
      %p263 = scmp.ne.s32.totalorder %s249, %s250
      %p264 = scmp.eq.s32.totalorder %s30, 1
      %p265 = por %p263, %p264
      %p267 = scmp.ne.s32.totalorder %s250, %s266
      %p268 = scmp.eq.s32.totalorder %s30, 0
      %p269 = por %p267, %p268
      %p270 = scmp.le.s32.totalorder 1, %s24
      %p271 = scmp.lt.s32.totalorder %s24, 3
      %p272 = pnand %p270, %p271
      %p273 = pneg %p272
      // Predicated region
      $region9: #{tpu_custom_call.1} parent=5 // pred_check
        _
      $region10: #{tpu_custom_call.1} parent=5 // pred_check_branch
        %275 = sbr.rel (%p272) target = $region12
      $region11: #{tpu_custom_call.1} parent=5 // pred_region
        %s276 = ssub.s32 %s24, 1
        // Predicated region
        $region13: #{tpu_custom_call.1} parent=11 // pred_check
          %p277 = pneg %p87
        $region14: #{tpu_custom_call.1} parent=11 // pred_check_branch
          %279 = sbr.rel (%p277) target = $region16
        $region15: #{tpu_custom_call.1} parent=11 // pred_region
          %281 = vsyncadd [#allocation8], 0
          %s282 = sshll.u32 %s1, 4
          %s283 = int_to_ptr.hbm [resolvable:$true] %s282
          %s284 = sshll.u32 [#allocation7], 4
          %s285 = int_to_ptr.vmem [resolvable:$true] %s284
          %290 = dma.hbm_to_vmem [thread:$0]  %s283, 128, %s285, [#allocation8], 64, 64, 4
        $region16: #{tpu_custom_call.1} parent=11 // pred_fallthru
          _
        // Predicated region
        $region17: #{tpu_custom_call.1} parent=11 // pred_check
          %p291 = pneg %p108
        $region18: #{tpu_custom_call.1} parent=11 // pred_check_branch
          %293 = sbr.rel (%p291) target = $region20
        $region19: #{tpu_custom_call.1} parent=11 // pred_region
          %295 = vsyncadd [#allocation8], 0
          %s296 = sshll.u32 %s2, 4
          %s297 = int_to_ptr.hbm [resolvable:$true] %s296
          %s298 = sshll.u32 [#allocation9], 4
          %s299 = int_to_ptr.vmem [resolvable:$true] %s298
          %304 = dma.hbm_to_vmem [thread:$0]  %s297, 1024, %s299, [#allocation8], 64, 64, 4
        $region20: #{tpu_custom_call.1} parent=11 // pred_fallthru
          _
        // Predicated region
        $region21: #{tpu_custom_call.1} parent=11 // pred_check
          %p305 = pneg %p129
        $region22: #{tpu_custom_call.1} parent=11 // pred_check_branch
          %307 = sbr.rel (%p305) target = $region24
        $region23: #{tpu_custom_call.1} parent=11 // pred_region
          %309 = vsyncadd [#allocation11], 0
          %s310 = sshll.u32 %s3, 4
          %s311 = int_to_ptr.hbm [resolvable:$true] %s310
          %s312 = sshll.u32 [#allocation10], 4
          %s313 = int_to_ptr.vmem [resolvable:$true] %s312
          %318 = dma.hbm_to_vmem [thread:$0]  %s311, 1024, %s313, [#allocation11], 64, 64, 4
        $region24: #{tpu_custom_call.1} parent=11 // pred_fallthru
          _
        // Predicated region
        $region25: #{tpu_custom_call.1} parent=11 // pred_check
          %p319 = pneg %p150
        $region26: #{tpu_custom_call.1} parent=11 // pred_check_branch
          %321 = sbr.rel (%p319) target = $region28
        $region27: #{tpu_custom_call.1} parent=11 // pred_region
          _
        $region28: #{tpu_custom_call.1} parent=11 // pred_fallthru
          _
        // Predicated region
        $region29: #{tpu_custom_call.1} parent=11 // pred_check
          %p322 = pneg %p171
        $region30: #{tpu_custom_call.1} parent=11 // pred_check_branch
          %324 = sbr.rel (%p322) target = $region32
        $region31: #{tpu_custom_call.1} parent=11 // pred_region
          %326 = vsyncadd [#allocation11], 0
          %s327 = sshll.u32 %s5, 4
          %s328 = int_to_ptr.hbm [resolvable:$true] %s327
          %s329 = sshll.u32 [#allocation12], 4
          %s330 = int_to_ptr.vmem [resolvable:$true] %s329
          %335 = dma.hbm_to_vmem [thread:$0]  %s328, 1024, %s330, [#allocation11], 64, 64, 4
        $region32: #{tpu_custom_call.1} parent=11 // pred_fallthru
          _
        // Predicated region
        $region33: #{tpu_custom_call.1} parent=11 // pred_check
          %p336 = pneg %p192
        $region34: #{tpu_custom_call.1} parent=11 // pred_check_branch
          %338 = sbr.rel (%p336) target = $region36
        $region35: #{tpu_custom_call.1} parent=11 // pred_region
          %340 = vsyncadd [#allocation14], 0
          %s341 = sshll.u32 %s6, 4
          %s342 = int_to_ptr.hbm [resolvable:$true] %s341
          %s343 = sshll.u32 [#allocation13], 4
          %s344 = int_to_ptr.vmem [resolvable:$true] %s343
          %349 = dma.hbm_to_vmem [thread:$0]  %s342, 1024, %s344, [#allocation14], 64, 64, 4
        $region36: #{tpu_custom_call.1} parent=11 // pred_fallthru
          _
        // Predicated region
        $region37: #{tpu_custom_call.1} parent=11 // pred_check
          %p350 = pneg %p213
        $region38: #{tpu_custom_call.1} parent=11 // pred_check_branch
          %352 = sbr.rel (%p350) target = $region40
        $region39: #{tpu_custom_call.1} parent=11 // pred_region
          _
        $region40: #{tpu_custom_call.1} parent=11 // pred_fallthru
          _
        // Predicated region
        $region41: #{tpu_custom_call.1} parent=11 // pred_check
          %p353 = pneg %p234
        $region42: #{tpu_custom_call.1} parent=11 // pred_check_branch
          %355 = sbr.rel (%p353) target = $region44
        $region43: #{tpu_custom_call.1} parent=11 // pred_region
          _
        $region44: #{tpu_custom_call.1} parent=11 // pred_fallthru
          _
      $region12: #{tpu_custom_call.1} parent=5 // pred_fallthru
        _
      %p356 = scmp.lt.s32.totalorder %s24, 2
      // Predicated region
      $region45: #{tpu_custom_call.1} parent=5 // pred_check
        %p357 = pneg %p356
      $region46: #{tpu_custom_call.1} parent=5 // pred_check_branch
        %359 = sbr.rel (%p357) target = $region48
      $region47: #{tpu_custom_call.1} parent=5 // pred_region
        // Predicated region
        $region49: #{tpu_custom_call.1} parent=47 // pred_check
          %p360 = pneg %p60
        $region50: #{tpu_custom_call.1} parent=47 // pred_check_branch
          %362 = sbr.rel (%p360) target = $region52
        $region51: #{tpu_custom_call.1} parent=47 // pred_region
          %s363 = sand.u32 %s50, 1
          %s364 = scalar_lea.sflag [#allocation5], %s363
          %s365 = sand.u32 %s50, 1
          %s366 = smul.addr %s365, 8
          %s367 = scalar_lea.vmem [#allocation4], %s366
          %s368 = ssub.s32 1, %s31
          %s369 = smul.u32 %s32, %s368
          %s370 = smul.u32 2, %s369
          %372 = vsyncadd %s364, 0
          %s373 = smul.addr %s370, 4
          %s374 = scalar_lea.hbm %s0, %s373
          %s375 = sshll.u32 %s374, 4
          %s376 = int_to_ptr.hbm [resolvable:$true] %s375
          %s377 = sshll.u32 %s367, 4
          %s378 = int_to_ptr.vmem [resolvable:$true] %s377
          %383 = dma.hbm_to_vmem [thread:$0]  %s376, 128, %s378, %s364, 64, 64, 4
        $region52: #{tpu_custom_call.1} parent=47 // pred_fallthru
          _
      $region48: #{tpu_custom_call.1} parent=5 // pred_fallthru
        _
      %p384 = scmp.le.s32.totalorder 1, %s24
      %p385 = scmp.lt.s32.totalorder %s24, 3
      %p386 = pnand %p384, %p385
      %p387 = pneg %p386
      // Predicated region
      $region53: #{tpu_custom_call.1} parent=5 // pred_check
        _
      $region54: #{tpu_custom_call.1} parent=5 // pred_check_branch
        %389 = sbr.rel (%p386) target = $region56
      $region55: #{tpu_custom_call.1} parent=5 // pred_region
        %s390 = ssub.s32 %s24, 1
        %s391 = sand.u32 %s53, 1
        %s392 = scalar_lea.sflag [#allocation5], %s391
        %s393 = sand.u32 %s53, 1
        %s394 = smul.addr %s393, 8
        %s395 = scalar_lea.vmem [#allocation4], %s394
        // Predicated region
        $region57: #{tpu_custom_call.1} parent=55 // pred_check
          %p396 = pneg %p66
        $region58: #{tpu_custom_call.1} parent=55 // pred_check_branch
          %398 = sbr.rel (%p396) target = $region60
        $region59: #{tpu_custom_call.1} parent=55 // pred_region
          %400 = dma.done %s392, 128
        $region60: #{tpu_custom_call.1} parent=55 // pred_fallthru
          _
        // Predicated region
        $region61: #{tpu_custom_call.1} parent=55 // pred_check
          %p401 = pneg %p87
        $region62: #{tpu_custom_call.1} parent=55 // pred_check_branch
          %403 = sbr.rel (%p401) target = $region64
        $region63: #{tpu_custom_call.1} parent=55 // pred_region
          %405 = dma.done [#allocation8], 128
        $region64: #{tpu_custom_call.1} parent=55 // pred_fallthru
          _
        // Predicated region
        $region65: #{tpu_custom_call.1} parent=55 // pred_check
          %p406 = pneg %p108
        $region66: #{tpu_custom_call.1} parent=55 // pred_check_branch
          %408 = sbr.rel (%p406) target = $region68
        $region67: #{tpu_custom_call.1} parent=55 // pred_region
          %410 = dma.done [#allocation8], 1024
        $region68: #{tpu_custom_call.1} parent=55 // pred_fallthru
          _
        // Predicated region
        $region69: #{tpu_custom_call.1} parent=55 // pred_check
          %p411 = pneg %p129
        $region70: #{tpu_custom_call.1} parent=55 // pred_check_branch
          %413 = sbr.rel (%p411) target = $region72
        $region71: #{tpu_custom_call.1} parent=55 // pred_region
          %415 = dma.done [#allocation11], 1024
        $region72: #{tpu_custom_call.1} parent=55 // pred_fallthru
          _
        // Predicated region
        $region73: #{tpu_custom_call.1} parent=55 // pred_check
          %p416 = pneg %p171
        $region74: #{tpu_custom_call.1} parent=55 // pred_check_branch
          %418 = sbr.rel (%p416) target = $region76
        $region75: #{tpu_custom_call.1} parent=55 // pred_region
          %420 = dma.done [#allocation11], 1024
        $region76: #{tpu_custom_call.1} parent=55 // pred_fallthru
          _
        // Predicated region
        $region77: #{tpu_custom_call.1} parent=55 // pred_check
          %p421 = pneg %p192
        $region78: #{tpu_custom_call.1} parent=55 // pred_check_branch
          %423 = sbr.rel (%p421) target = $region80
        $region79: #{tpu_custom_call.1} parent=55 // pred_region
          %425 = dma.done [#allocation14], 1024
        $region80: #{tpu_custom_call.1} parent=55 // pred_fallthru
          _
        %s426 = sand.u32 %s53, 1
        %s427 = scalar_lea.sflag [#allocation5], %s426
        %s428 = sand.u32 %s53, 1
        %s429 = smul.addr %s428, 8
        %s430 = scalar_lea.vmem [#allocation4], %s429
        %p431 = pneg %p66
        %p432 = pneg %p63
        %p433 = pneg %p87
        %p434 = pneg %p84
        %p435 = pneg %p108
        %p436 = pneg %p105
        %p437 = pneg %p129
        %p438 = pneg %p126
        %p439 = pneg %p150
        %p440 = pneg %p147
        %p441 = pneg %p171
        %p442 = pneg %p168
        %p443 = pneg %p192
        %p444 = pneg %p189
        %p445 = pneg %p213
        %p446 = pneg %p210
        %p447 = pneg %p234
        %p448 = pneg %p231
        %p449 = pneg %p262
        %p450 = pneg %p259
        %s451 = sand.u32 %s249, 1
        %s452 = scalar_lea.sflag [#allocation6], %s451
        %s453 = sand.u32 %s249, 1
        %s454 = smul.addr %s453, 16
        %s455 = scalar_lea.vmem [#allocation15], %s454
        %s456 = ssub.s32 1, %s33
        %s457 = smul.u32 %s34, %s456
        %s458 = smul.u32 2, %s457
        %s459 = smul.u32 %s34, %s33
        %s460 = smul.u32 2, %s459
        %s462 = smul.u32 %s34, 16
        %p463 = scmp.eq.s32.totalorder %s33, 0
        // Predicated region
        $region81: #{tpu_custom_call.1} parent=55 // pred_check
          %p464 = pneg %p463
        $region82: #{tpu_custom_call.1} parent=55 // pred_check_branch
          %466 = sbr.rel (%p464) target = $region84
        $region83: #{tpu_custom_call.1} parent=55 // pred_region
          %v467 = vld [vmem:[%s395] sm:$0xf]
          %v468 = vld [vmem:[%s395 + $0x4] sm:$0xf]
          %v469 = vld [vmem:[#allocation7] sm:$0xf]
          %v470 = vld [vmem:[#allocation7 + $0x4] sm:$0xf]
          %s471 = sshra.s32 %s462, 3
          %s472 = sand.u32 %s462, 7
          %s473 = smul.addr %s471, 4
          %s474 = scalar_lea.vmem [#allocation7], %s473
          %v475 = vld [vmem:[%s474] sm:$0xf]
          %v476 = vld [vmem:[%s474 + $0x4] sm:$0xf]
          %v479 = vunpack.c.l.b16 %v467
          %v480 = vunpack.c.l.b16 %v468
          %v481 = vpack.c.b16 %v480, %v479
          %v484 = vunpack.c.l.b16 %v469
          %v485 = vunpack.c.l.b16 %v470
          %v486 = vpack.c.b16 %v485, %v484
          %vm488 = vcmask 130048
          %v490 = vsel %vm488, %v481, 0
          %492 = vmatpush.bf16.msra.mxu0 0
          %493 = vmatpush.bf16.msra.mxu0 0
          %494 = vmatpush.bf16.msra.mxu0 0
          %495 = vmatpush.bf16.msra.mxu0 0
          %496 = vmatpush.bf16.msra.mxu0 0
          %497 = vmatpush.bf16.msra.mxu0 0
          %498 = vmatpush.bf16.msra.mxu0 0
          %499 = vmatpush.bf16.msra.mxu0 %v486
          %500 = vmatmul.bf16.gmra.mxu0 %v490
          %v501 = vpop.f32.mrf.mxu0
          %v502 = vadd.f32 0.0, %v501
          %v503 = vpop.f32.mrf.mxu0
          %v504 = vadd.f32 0.0, %v503
          %505 = vdwg.mxu0
          %v506 = vld [vmem:[#allocation9] sm:$0xf]
          %v507 = vld [vmem:[#allocation9 + $0x4] sm:$0xf]
          %v508 = vld [vmem:[#allocation9 + $0x8] sm:$0xf]
          %v509 = vld [vmem:[#allocation9 + $0xc] sm:$0xf]
          %v510 = vld [vmem:[#allocation9 + $0x10] sm:$0xf]
          %v511 = vld [vmem:[#allocation9 + $0x14] sm:$0xf]
          %v512 = vld [vmem:[#allocation9 + $0x18] sm:$0xf]
          %v513 = vld [vmem:[#allocation9 + $0x1c] sm:$0xf]
          %v514 = vld [vmem:[#allocation9 + $0x20] sm:$0xf]
          %v515 = vld [vmem:[#allocation9 + $0x24] sm:$0xf]
          %v516 = vld [vmem:[#allocation9 + $0x28] sm:$0xf]
          %v517 = vld [vmem:[#allocation9 + $0x2c] sm:$0xf]
          %v518 = vld [vmem:[#allocation9 + $0x30] sm:$0xf]
          %v519 = vld [vmem:[#allocation9 + $0x34] sm:$0xf]
          %v520 = vld [vmem:[#allocation9 + $0x38] sm:$0xf]
          %v521 = vld [vmem:[#allocation9 + $0x3c] sm:$0xf]
          %v522 = vpack.c.bf16 %v504, %v502
          %v523 = vld [vmem:[#allocation10] sm:$0xf]
          %v524 = vld [vmem:[#allocation10 + $0x4] sm:$0xf]
          %v525 = vld [vmem:[#allocation10 + $0x8] sm:$0xf]
          %v526 = vld [vmem:[#allocation10 + $0xc] sm:$0xf]
          %v527 = vld [vmem:[#allocation10 + $0x10] sm:$0xf]
          %v528 = vld [vmem:[#allocation10 + $0x14] sm:$0xf]
          %v529 = vld [vmem:[#allocation10 + $0x18] sm:$0xf]
          %v530 = vld [vmem:[#allocation10 + $0x1c] sm:$0xf]
          %v531 = vld [vmem:[#allocation10 + $0x20] sm:$0xf]
          %v532 = vld [vmem:[#allocation10 + $0x24] sm:$0xf]
          %v533 = vld [vmem:[#allocation10 + $0x28] sm:$0xf]
          %v534 = vld [vmem:[#allocation10 + $0x2c] sm:$0xf]
          %v535 = vld [vmem:[#allocation10 + $0x30] sm:$0xf]
          %v536 = vld [vmem:[#allocation10 + $0x34] sm:$0xf]
          %v537 = vld [vmem:[#allocation10 + $0x38] sm:$0xf]
          %v538 = vld [vmem:[#allocation10 + $0x3c] sm:$0xf]
          %v555 = vunpack.c.l.b16 %v523
          %v556 = vunpack.c.l.b16 %v524
          %v557 = vunpack.c.l.b16 %v525
          %v558 = vunpack.c.l.b16 %v526
          %v559 = vunpack.c.l.b16 %v527
          %v560 = vunpack.c.l.b16 %v528
          %v561 = vunpack.c.l.b16 %v529
          %v562 = vunpack.c.l.b16 %v530
          %v563 = vunpack.c.l.b16 %v531
          %v564 = vunpack.c.l.b16 %v532
          %v565 = vunpack.c.l.b16 %v533
          %v566 = vunpack.c.l.b16 %v534
          %v567 = vunpack.c.l.b16 %v535
          %v568 = vunpack.c.l.b16 %v536
          %v569 = vunpack.c.l.b16 %v537
          %v570 = vunpack.c.l.b16 %v538
          %v571 = vpack.c.b16 %v556, %v555
          %v572 = vpack.c.b16 %v558, %v557
          %v573 = vpack.c.b16 %v560, %v559
          %v574 = vpack.c.b16 %v562, %v561
          %v575 = vpack.c.b16 %v564, %v563
          %v576 = vpack.c.b16 %v566, %v565
          %v577 = vpack.c.b16 %v568, %v567
          %v578 = vpack.c.b16 %v570, %v569
          %587 = vmatpush.bf16.msra.mxu0 %v578
          %588 = vmatpush.bf16.msra.mxu0 %v577
          %589 = vmatpush.bf16.msra.mxu0 %v576
          %590 = vmatpush.bf16.msra.mxu0 %v575
          %591 = vmatpush.bf16.msra.mxu0 %v574
          %592 = vmatpush.bf16.msra.mxu0 %v573
          %593 = vmatpush.bf16.msra.mxu0 %v572
          %594 = vmatpush.bf16.msra.mxu0 %v571
          %595 = vmatmul.bf16.gmra.mxu0 %v522
          %v596 = vpop.f32.mrf.mxu0
          %v597 = vadd.f32 0.0, %v596
          %v598 = vpop.f32.mrf.mxu0
          %v599 = vadd.f32 0.0, %v598
          %600 = vdwg.mxu0
          %v603 = vunpack.c.l.b16 %v475
          %v604 = vunpack.c.l.b16 %v476
          %v605 = vpack.c.b16 %v604, %v603
          %v623 = vunpack.c.l.b16 %v506
          %v624 = vunpack.c.l.b16 %v507
          %v625 = vunpack.c.l.b16 %v508
          %v626 = vunpack.c.l.b16 %v509
          %v627 = vunpack.c.l.b16 %v510
          %v628 = vunpack.c.l.b16 %v511
          %v629 = vunpack.c.l.b16 %v512
          %v630 = vunpack.c.l.b16 %v513
          %v631 = vunpack.c.l.b16 %v514
          %v632 = vunpack.c.l.b16 %v515
          %v633 = vunpack.c.l.b16 %v516
          %v634 = vunpack.c.l.b16 %v517
          %v635 = vunpack.c.l.b16 %v518
          %v636 = vunpack.c.l.b16 %v519
          %v637 = vunpack.c.l.b16 %v520
          %v638 = vunpack.c.l.b16 %v521
          %v639 = vpack.c.b16 %v624, %v623
          %v640 = vpack.c.b16 %v626, %v625
          %v641 = vpack.c.b16 %v628, %v627
          %v642 = vpack.c.b16 %v630, %v629
          %v643 = vpack.c.b16 %v632, %v631
          %v644 = vpack.c.b16 %v634, %v633
          %v645 = vpack.c.b16 %v636, %v635
          %v646 = vpack.c.b16 %v638, %v637
          %655 = vmatpush.bf16.msra.mxu0 %v646
          %656 = vmatpush.bf16.msra.mxu0 %v645
          %657 = vmatpush.bf16.msra.mxu0 %v644
          %658 = vmatpush.bf16.msra.mxu0 %v643
          %659 = vmatpush.bf16.msra.mxu0 %v642
          %660 = vmatpush.bf16.msra.mxu0 %v641
          %661 = vmatpush.bf16.msra.mxu0 %v640
          %662 = vmatpush.bf16.msra.mxu0 %v639
          %663 = vmatmul.bf16.gmra.mxu0 %v605
          %v664 = vpop.f32.mrf.mxu0
          %v665 = vadd.f32 %v597, %v664
          %v666 = vpop.f32.mrf.mxu0
          %v667 = vadd.f32 %v599, %v666
          %668 = vdwg.mxu0
          %v669 = vld [vmem:[%s4] sm:$0x1]
          %v671 = vperm.slane %v669, 0
          %v673 = vadd.f32 %v665, %v671
          %v674 = vadd.f32 %v667, %v671
          %v675 = vmax.f32 %v673, 0.0
          %v676 = vmax.f32 %v674, 0.0
          %v677 = vpack.c.bf16 %v676, %v675
          %v678 = vld [vmem:[#allocation12] sm:$0xf]
          %v679 = vld [vmem:[#allocation12 + $0x4] sm:$0xf]
          %v680 = vld [vmem:[#allocation12 + $0x8] sm:$0xf]
          %v681 = vld [vmem:[#allocation12 + $0xc] sm:$0xf]
          %v682 = vld [vmem:[#allocation12 + $0x10] sm:$0xf]
          %v683 = vld [vmem:[#allocation12 + $0x14] sm:$0xf]
          %v684 = vld [vmem:[#allocation12 + $0x18] sm:$0xf]
          %v685 = vld [vmem:[#allocation12 + $0x1c] sm:$0xf]
          %v686 = vld [vmem:[#allocation12 + $0x20] sm:$0xf]
          %v687 = vld [vmem:[#allocation12 + $0x24] sm:$0xf]
          %v688 = vld [vmem:[#allocation12 + $0x28] sm:$0xf]
          %v689 = vld [vmem:[#allocation12 + $0x2c] sm:$0xf]
          %v690 = vld [vmem:[#allocation12 + $0x30] sm:$0xf]
          %v691 = vld [vmem:[#allocation12 + $0x34] sm:$0xf]
          %v692 = vld [vmem:[#allocation12 + $0x38] sm:$0xf]
          %v693 = vld [vmem:[#allocation12 + $0x3c] sm:$0xf]
          %v694 = vld [vmem:[%s7] sm:$0x1]
          %v696 = vperm.slane %v694, 0
          %v714 = vunpack.c.l.b16 %v678
          %v715 = vunpack.c.l.b16 %v679
          %v716 = vunpack.c.l.b16 %v680
          %v717 = vunpack.c.l.b16 %v681
          %v718 = vunpack.c.l.b16 %v682
          %v719 = vunpack.c.l.b16 %v683
          %v720 = vunpack.c.l.b16 %v684
          %v721 = vunpack.c.l.b16 %v685
          %v722 = vunpack.c.l.b16 %v686
          %v723 = vunpack.c.l.b16 %v687
          %v724 = vunpack.c.l.b16 %v688
          %v725 = vunpack.c.l.b16 %v689
          %v726 = vunpack.c.l.b16 %v690
          %v727 = vunpack.c.l.b16 %v691
          %v728 = vunpack.c.l.b16 %v692
          %v729 = vunpack.c.l.b16 %v693
          %v730 = vpack.c.b16 %v715, %v714
          %v731 = vpack.c.b16 %v717, %v716
          %v732 = vpack.c.b16 %v719, %v718
          %v733 = vpack.c.b16 %v721, %v720
          %v734 = vpack.c.b16 %v723, %v722
          %v735 = vpack.c.b16 %v725, %v724
          %v736 = vpack.c.b16 %v727, %v726
          %v737 = vpack.c.b16 %v729, %v728
          %746 = vmatpush.bf16.msra.mxu0 %v737
          %747 = vmatpush.bf16.msra.mxu0 %v736
          %748 = vmatpush.bf16.msra.mxu0 %v735
          %749 = vmatpush.bf16.msra.mxu0 %v734
          %750 = vmatpush.bf16.msra.mxu0 %v733
          %751 = vmatpush.bf16.msra.mxu0 %v732
          %752 = vmatpush.bf16.msra.mxu0 %v731
          %753 = vmatpush.bf16.msra.mxu0 %v730
          %754 = vmatmul.bf16.gmra.mxu0 %v677
          %v755 = vpop.f32.mrf.mxu0
          %v756 = vadd.f32 %v696, %v755
          %v757 = vpop.f32.mrf.mxu0
          %v758 = vadd.f32 %v696, %v757
          %759 = vdwg.mxu0
          %s760 = scalar_lea.vmem [#allocation2], %s462
          %761 = vst [vmem:[%s760] sm:$0xff] %v756
          %762 = vst [vmem:[%s760 + $0x8] sm:$0xff] %v758
          %v763 = vld [vmem:[#allocation13] sm:$0xf]
          %v764 = vld [vmem:[#allocation13 + $0x4] sm:$0xf]
          %v765 = vld [vmem:[#allocation13 + $0x8] sm:$0xf]
          %v766 = vld [vmem:[#allocation13 + $0xc] sm:$0xf]
          %v767 = vld [vmem:[#allocation13 + $0x10] sm:$0xf]
          %v768 = vld [vmem:[#allocation13 + $0x14] sm:$0xf]
          %v769 = vld [vmem:[#allocation13 + $0x18] sm:$0xf]
          %v770 = vld [vmem:[#allocation13 + $0x1c] sm:$0xf]
          %v771 = vld [vmem:[#allocation13 + $0x20] sm:$0xf]
          %v772 = vld [vmem:[#allocation13 + $0x24] sm:$0xf]
          %v773 = vld [vmem:[#allocation13 + $0x28] sm:$0xf]
          %v774 = vld [vmem:[#allocation13 + $0x2c] sm:$0xf]
          %v775 = vld [vmem:[#allocation13 + $0x30] sm:$0xf]
          %v776 = vld [vmem:[#allocation13 + $0x34] sm:$0xf]
          %v777 = vld [vmem:[#allocation13 + $0x38] sm:$0xf]
          %v778 = vld [vmem:[#allocation13 + $0x3c] sm:$0xf]
          %v795 = vunpack.c.l.b16 %v763
          %v796 = vunpack.c.l.b16 %v764
          %v797 = vunpack.c.l.b16 %v765
          %v798 = vunpack.c.l.b16 %v766
          %v799 = vunpack.c.l.b16 %v767
          %v800 = vunpack.c.l.b16 %v768
          %v801 = vunpack.c.l.b16 %v769
          %v802 = vunpack.c.l.b16 %v770
          %v803 = vunpack.c.l.b16 %v771
          %v804 = vunpack.c.l.b16 %v772
          %v805 = vunpack.c.l.b16 %v773
          %v806 = vunpack.c.l.b16 %v774
          %v807 = vunpack.c.l.b16 %v775
          %v808 = vunpack.c.l.b16 %v776
          %v809 = vunpack.c.l.b16 %v777
          %v810 = vunpack.c.l.b16 %v778
          %v811 = vpack.c.b16 %v796, %v795
          %v812 = vpack.c.b16 %v798, %v797
          %v813 = vpack.c.b16 %v800, %v799
          %v814 = vpack.c.b16 %v802, %v801
          %v815 = vpack.c.b16 %v804, %v803
          %v816 = vpack.c.b16 %v806, %v805
          %v817 = vpack.c.b16 %v808, %v807
          %v818 = vpack.c.b16 %v810, %v809
          %827 = vmatpush.bf16.msra.mxu0 %v818
          %828 = vmatpush.bf16.msra.mxu0 %v817
          %829 = vmatpush.bf16.msra.mxu0 %v816
          %830 = vmatpush.bf16.msra.mxu0 %v815
          %831 = vmatpush.bf16.msra.mxu0 %v814
          %832 = vmatpush.bf16.msra.mxu0 %v813
          %833 = vmatpush.bf16.msra.mxu0 %v812
          %834 = vmatpush.bf16.msra.mxu0 %v811
          %835 = vmatmul.bf16.gmra.mxu0 %v677
          %v836 = vpop.f32.mrf.mxu0
          %v837 = vadd.f32 0.0, %v836
          %v838 = vpop.f32.mrf.mxu0
          %v839 = vadd.f32 0.0, %v838
          %840 = vdwg.mxu0
          %v841 = vpack.c.bf16 %v839, %v837
          %p842 = scmp.eq.s32.totalorder %s34, 0
          // Predicated region
          $region85: #{tpu_custom_call.1} parent=83 // pred_check
            %p843 = pneg %p842
          $region86: #{tpu_custom_call.1} parent=83 // pred_check_branch
            %845 = sbr.rel (%p843) target = $region88
          $region87: #{tpu_custom_call.1} parent=83 // pred_region
            %846 = vst [vmem:[#allocation3] sm:$0xff] 0.0
            %847 = vst [vmem:[#allocation3 + $0x8] sm:$0xff] 0.0
          $region88: #{tpu_custom_call.1} parent=83 // pred_fallthru
            _
          %v848 = vld [vmem:[#allocation3] sm:$0xff]
          %v849 = vld [vmem:[#allocation3 + $0x8] sm:$0xff]
          %851 = vxpose.xlu0.c.b16.start [1/8] %v481, 128
          %852 = vxpose.xlu0.c.b16.cont [2/8] 0, 128
          %853 = vxpose.xlu0.c.b16.cont [3/8] 0, 128
          %854 = vxpose.xlu0.c.b16.cont [4/8] 0, 128
          %855 = vxpose.xlu0.c.b16.cont [5/8] 0, 128
          %856 = vxpose.xlu0.c.b16.cont [6/8] 0, 128
          %857 = vxpose.xlu0.c.b16.cont [7/8] 0, 128
          %858 = vxpose.xlu0.c.b16.end [8/8] 0, 128
          %v859 = vpop.trf.xlu0
          %v860 = vpop.trf.xlu0
          %v861 = vpop.trf.xlu0
          %v862 = vpop.trf.xlu0
          %v863 = vpop.trf.xlu0
          %v864 = vpop.trf.xlu0
          %v865 = vpop.trf.xlu0
          %v866 = vpop.trf.xlu0
          %v868 = vsel %vm488, %v859, 0
          %870 = vmatpush.bf16.msra.mxu0 0
          %871 = vmatpush.bf16.msra.mxu0 0
          %872 = vmatpush.bf16.msra.mxu0 0
          %873 = vmatpush.bf16.msra.mxu0 0
          %874 = vmatpush.bf16.msra.mxu0 0
          %875 = vmatpush.bf16.msra.mxu0 0
          %876 = vmatpush.bf16.msra.mxu0 0
          %877 = vmatpush.bf16.msra.mxu0 %v841
          %878 = vmatmul.bf16.gmra.mxu0 %v868
          %v879 = vpop.f32.mrf.mxu0
          %v880 = vadd.f32 0.0, %v879
          %v881 = vpop.f32.mrf.mxu0
          %v882 = vadd.f32 0.0, %v881
          %883 = vdwg.mxu0
          %v884 = vadd.f32 %v848, %v880
          %v885 = vadd.f32 %v849, %v882
          %886 = vst [vmem:[#allocation3] sm:$0xff] %v884
          %887 = vst [vmem:[#allocation3 + $0x8] sm:$0xff] %v885
        $region84: #{tpu_custom_call.1} parent=55 // pred_fallthru
          _
        %p888 = scmp.eq.s32.totalorder %s33, 1
        // Predicated region
        $region89: #{tpu_custom_call.1} parent=55 // pred_check
          %p889 = pneg %p888
        $region90: #{tpu_custom_call.1} parent=55 // pred_check_branch
          %891 = sbr.rel (%p889) target = $region92
        $region91: #{tpu_custom_call.1} parent=55 // pred_region
          %s892 = scalar_lea.vmem [#allocation3], %s462
          %v893 = vld [vmem:[%s892] sm:$0xff]
          %v894 = vld [vmem:[%s892 + $0x8] sm:$0xff]
          %s895 = scalar_lea.vmem [#allocation2], %s462
          %v896 = vld [vmem:[%s895] sm:$0xff]
          %v897 = vld [vmem:[%s895 + $0x8] sm:$0xff]
          %v898 = vadd.f32 %v896, %v893
          %v899 = vadd.f32 %v897, %v894
          %v900 = vld [vmem:[%s8] sm:$0x1]
          %v902 = vperm.slane %v900, 0
          %v904 = vadd.f32 %v898, %v902
          %v905 = vadd.f32 %v899, %v902
          %906 = vmax.xlane.f32.xlu0 %v904
          %v907 = vpop.xlane.xlu0 %906
          %908 = vmax.xlane.f32.xlu0 %v905
          %v909 = vpop.xlane.xlu0 %908
          %v910 = vsub.f32 %v904, %v907
          %v911 = vsub.f32 %v905, %v909
          %v912 = vmul.f32 %v910, 1.442695
          %v913 = vpow.pop %v912
          %v914 = vmul.f32 %v911, 1.442695
          %v915 = vpow.pop %v914
          %916 = vadd.xlane.f32.xlu0 %v913
          %v917 = vpop.xlane.xlu0 %916
          %918 = vadd.xlane.f32.xlu0 %v915
          %v919 = vpop.xlane.xlu0 %918
          %v920 = vlog2.pop %v917
          %v921 = vmul.f32 %v920, 0.6931472
          %v922 = vlog2.pop %v919
          %v923 = vmul.f32 %v922, 0.6931472
          %v924 = vadd.f32 %v907, %v921
          %v925 = vadd.f32 %v909, %v923
          %v926 = vsub.f32 %v904, %v924
          %v927 = vsub.f32 %v905, %v925
          %928 = vst [vmem:[%s455] sm:$0xff] %v926
          %929 = vst [vmem:[%s455 + $0x8] sm:$0xff] %v927
        $region92: #{tpu_custom_call.1} parent=55 // pred_fallthru
          _
        %s930 = sand.u32 %s249, 1
        %s931 = scalar_lea.sflag [#allocation6], %s930
        %s932 = sand.u32 %s249, 1
        %s933 = smul.addr %s932, 16
        %s934 = scalar_lea.vmem [#allocation15], %s933
        // Predicated region
        $region93: #{tpu_custom_call.1} parent=55 // pred_check
          %p935 = pneg %p259
        $region94: #{tpu_custom_call.1} parent=55 // pred_check_branch
          %937 = sbr.rel (%p935) target = $region96
        $region95: #{tpu_custom_call.1} parent=55 // pred_region
          %s938 = smul.u32 %s34, %s33
          %s939 = smul.u32 2, %s938
          %941 = vsyncadd %s931, 0
          %s942 = smul.addr %s939, 8
          %s943 = scalar_lea.hbm %s9, %s942
          %s944 = sshll.u32 %s934, 4
          %s945 = int_to_ptr.vmem [resolvable:$true] %s944
          %s946 = sshll.u32 %s943, 4
          %s947 = int_to_ptr.hbm [resolvable:$true] %s946
          %952 = dma.vmem_to_hbm [thread:$0]  %s945, 256, %s947, %s931, 128, 128, 8
        $region96: #{tpu_custom_call.1} parent=55 // pred_fallthru
          _
      $region56: #{tpu_custom_call.1} parent=5 // pred_fallthru
        _
      %p953 = scmp.le.s32.totalorder 2, %s24
      // Predicated region
      $region97: #{tpu_custom_call.1} parent=5 // pred_check
        %p954 = pneg %p953
      $region98: #{tpu_custom_call.1} parent=5 // pred_check_branch
        %956 = sbr.rel (%p954) target = $region100
      $region99: #{tpu_custom_call.1} parent=5 // pred_region
        %s957 = ssub.s32 %s24, 2
        // Predicated region
        $region101: #{tpu_custom_call.1} parent=99 // pred_check
          %p958 = pneg %p265
        $region102: #{tpu_custom_call.1} parent=99 // pred_check_branch
          %960 = sbr.rel (%p958) target = $region104
        $region103: #{tpu_custom_call.1} parent=99 // pred_region
          %s961 = sand.u32 %s250, 1
          %s962 = scalar_lea.sflag [#allocation6], %s961
          %s963 = sand.u32 %s250, 1
          %s964 = smul.addr %s963, 16
          %s965 = scalar_lea.vmem [#allocation15], %s964
          %967 = dma.done %s962, 256
        $region104: #{tpu_custom_call.1} parent=99 // pred_fallthru
          _
      $region100: #{tpu_custom_call.1} parent=5 // pred_fallthru
        _
    $region6: #{tpu_custom_call.1} parent=1 // loop_footer
      %s28 = sadd.s32 1, %s24
    $region7: #{tpu_custom_call.1} parent=1 // loop_footer_branch
      %23 = sbr.rel target = $region3
    $region8: #{tpu_custom_call.1} parent=1 // loop_exit
      _
    %968 = vsyncpa [#allocation5], 1
    %s969 = scalar_lea.sflag [#allocation5], 1
    %970 = vsyncpa %s969, 1
    %971 = vsyncpa [#allocation8], 1
    %972 = vsyncpa [#allocation11], 1
    %973 = vsyncpa [#allocation14], 1
    %974 = vsyncpa [#allocation6], 1
    %s975 = scalar_lea.sflag [#allocation6], 1
    %976 = vsyncpa %s975, 1

// kernel: tpu_custom_call.1
$region0: #{tpu_custom_call.1}
  #allocation0 [shape = 'u32[]', space=smem, size = 0x4, offset = 0x4, fixed_abs, tag = 'smem constant byte address 0x4 - core index']
  #allocation1 [shape = 'u32[72,128]{1,0:T(1,128)}', space=vmem, size = 0x9000, scoped, tag = 'internal scratch']
  #allocation2 [shape = 'f32[16,128]{1,0:T(8,128)}', space=vmem, size = 0x2000, scoped, tag = 'scratch operand']
  #allocation3 [shape = 'f32[16,128]{1,0:T(8,128)}', space=vmem, size = 0x2000, scoped, tag = 'scratch operand']
  %s0 = inlined_call_operand.hbm [shape: bf16[16,16], index: 0, kind: input, shape index: {}]
  %s1 = inlined_call_operand.hbm [shape: bf16[16,128], index: 1, kind: input, shape index: {}]
  %s2 = inlined_call_operand.hbm [shape: bf16[128,128], index: 2, kind: input, shape index: {}]
  %s3 = inlined_call_operand.hbm [shape: bf16[128,128], index: 3, kind: input, shape index: {}]
  %s4 = inlined_call_operand.vmem [shape: f32[1,128], index: 4, kind: input, shape index: {}]
  %s5 = inlined_call_operand.hbm [shape: bf16[128,128], index: 5, kind: input, shape index: {}]
  %s6 = inlined_call_operand.hbm [shape: bf16[128,128], index: 6, kind: input, shape index: {}]
  %s7 = inlined_call_operand.vmem [shape: f32[1,128], index: 7, kind: input, shape index: {}]
  %s8 = inlined_call_operand.vmem [shape: f32[1,128], index: 8, kind: input, shape index: {}]
  %s9 = inlined_call_operand.hbm [shape: f32[16,128], index: 9, kind: output, shape index: {}]
  %s10 = sld [smem:[#allocation0]]
  $region105: #{tpu_custom_call.1} parent=0
    _
  %s12 = ssub.s32 1, %s10
  %s13 = scalar_select 0, %s12, %s10
  $region1: #{tpu_custom_call.1} parent=0
    #allocation4 [shape = 'u8[8192]{0}', space=vmem, size = 0x2000, scoped, tag = 'input window, operand 0']
    #allocation5 [shape = 's32[2]{0}', space=sflag, size = 0x8, scoped, tag = 'scoped memory for tpu_custom_call.1']
    #allocation6 [shape = 's32[2]{0}', space=sflag, size = 0x8, scoped, tag = 'scoped memory for tpu_custom_call.1']
    #allocation7 [shape = 'u8[4096]{0}', space=vmem, size = 0x1000, scoped, tag = 'input window, operand 1, single buffered']
    #allocation8 [shape = 's32[1]{0}', space=sflag, size = 0x4, scoped, tag = 'scoped memory for tpu_custom_call.1']
    #allocation9 [shape = 'u8[32768]{0}', space=vmem, size = 0x8000, scoped, tag = 'input window, operand 2, single buffered']
    #allocation10 [shape = 'u8[32768]{0}', space=vmem, size = 0x8000, scoped, tag = 'input window, operand 3, single buffered']
    #allocation11 [shape = 's32[1]{0}', space=sflag, size = 0x4, scoped, tag = 'scoped memory for tpu_custom_call.1']
    #allocation12 [shape = 'u8[32768]{0}', space=vmem, size = 0x8000, scoped, tag = 'input window, operand 5, single buffered']
    #allocation13 [shape = 'u8[32768]{0}', space=vmem, size = 0x8000, scoped, tag = 'input window, operand 6, single buffered']
    #allocation14 [shape = 's32[1]{0}', space=sflag, size = 0x4, scoped, tag = 'scoped memory for tpu_custom_call.1']
    #allocation15 [shape = 'u8[16384]{0}', space=vmem, size = 0x4000, scoped, tag = 'output window, operand 0']
    %14 = vsyncpa [#allocation5], 0
    %s15 = scalar_lea.sflag [#allocation5], 1
    %16 = vsyncpa %s15, 0
    %17 = vsyncpa [#allocation8], 0
    %18 = vsyncpa [#allocation11], 0
    %19 = vsyncpa [#allocation14], 0
    %20 = vsyncpa [#allocation6], 0
    %s21 = scalar_lea.sflag [#allocation6], 1
    %22 = vsyncpa %s21, 0
    loop: start=0, step=1, limit=4
    $region2: #{tpu_custom_call.1} parent=1 // loop_pre_header
      _
    $region3: #{tpu_custom_call.1} parent=1 // loop_header
      %s24 = sphi 0, %s28
      %p25 = scmp.ge.s32.totalorder %s24, 4
      %s31 = sphi 0, %s43
      %s32 = sphi 0, %s39
      %s33 = sphi 0, %s31
      %s34 = sphi 0, %s32
      %s35 = sphi 0, %s33
      %s36 = sphi 0, %s34
      %s50 = sphi 0, %s52
      %s53 = sphi 0, %s50
      %s54 = sphi 0, %s53
      %s70 = sphi 0, %s54
      %s74 = sphi 0, %s74
      %s76 = sphi 0, %s74
      %s77 = sphi 0, %s76
      %s91 = sphi 0, %s77
      %s95 = sphi 0, %s95
      %s97 = sphi 0, %s95
      %s98 = sphi 0, %s97
      %s112 = sphi 0, %s98
      %s116 = sphi 0, %s116
      %s118 = sphi 0, %s116
      %s119 = sphi 0, %s118
      %s133 = sphi 0, %s119
      %s137 = sphi 0, %s137
      %s139 = sphi 0, %s137
      %s140 = sphi 0, %s139
      %s154 = sphi 0, %s140
      %s158 = sphi 0, %s158
      %s160 = sphi 0, %s158
      %s161 = sphi 0, %s160
      %s175 = sphi 0, %s161
      %s179 = sphi 0, %s179
      %s181 = sphi 0, %s179
      %s182 = sphi 0, %s181
      %s196 = sphi 0, %s182
      %s200 = sphi 0, %s200
      %s202 = sphi 0, %s200
      %s203 = sphi 0, %s202
      %s217 = sphi 0, %s203
      %s221 = sphi 0, %s221
      %s223 = sphi 0, %s221
      %s224 = sphi 0, %s223
      %s238 = sphi 0, %s224
      %s246 = sphi 0, %s248
      %s249 = sphi 0, %s246
      %s250 = sphi 0, %s249
      %s266 = sphi 0, %s250
    $region4: #{tpu_custom_call.1} parent=1 // loop_header_branch
      %27 = sbr.rel (%p25) target = $region8
    $region5: #{tpu_custom_call.1} parent=1 // loop_body
      %s29 = ssub.s32 %s24, 1
      %s30 = ssub.s32 %s24, 2
      %s37 = sadd.s32 1, %s32
      %p38 = scmp.ge.s32.totalorder %s37, 1
      %s39 = scalar_select %p38, 0, %s37
      %s40 = sadd.s32 1, %s31
      %s41 = scalar_select %p38, %s40, %s31
      %p42 = scmp.ge.s32.totalorder %s41, 2
      %s43 = scalar_select %p42, 0, %s41
      %s44 = ssub.s32 1, %s31
      %s45 = smul.u32 %s32, %s44
      %s46 = ssub.s32 1, %s43
      %s47 = smul.u32 %s39, %s46
      %s48 = ssub.s32 %s45, %s47
      %p49 = scmp.eq.s32.totalorder %s48, 0
      %s51 = sadd.s32 %s50, 1
      %s52 = scalar_select %p49, %s50, %s51
      %p55 = pneg %p49
      %p56 = scmp.eq.s32.totalorder %s24, 1
      %p57 = por %p55, %p56
      %p58 = scmp.ne.s32.totalorder %s50, %s53
      %p59 = scmp.eq.s32.totalorder %s24, 0
      %p60 = por %p58, %p59
      %p61 = scmp.ne.s32.totalorder %s50, %s53
      %p62 = scmp.eq.s32.totalorder %s29, 1
      %p63 = por %p61, %p62
      %p64 = scmp.ne.s32.totalorder %s53, %s54
      %p65 = scmp.eq.s32.totalorder %s29, 0
      %p66 = por %p64, %p65
      %p67 = scmp.ne.s32.totalorder %s53, %s54
      %p68 = scmp.eq.s32.totalorder %s30, 1
      %p69 = por %p67, %p68
      %p71 = scmp.ne.s32.totalorder %s54, %s70
      %p72 = scmp.eq.s32.totalorder %s30, 0
      %p73 = por %p71, %p72
      %s75 = sadd.s32 %s74, 1
      %p78 = scmp.eq.s32.totalorder %s24, 1
      %p79 = scmp.ne.s32.totalorder %s74, %s76
      %p80 = scmp.eq.s32.totalorder %s24, 0
      %p81 = por %p79, %p80
      %p82 = scmp.ne.s32.totalorder %s74, %s76
      %p83 = scmp.eq.s32.totalorder %s29, 1
      %p84 = por %p82, %p83
      %p85 = scmp.ne.s32.totalorder %s76, %s77
      %p86 = scmp.eq.s32.totalorder %s29, 0
      %p87 = por %p85, %p86
      %p88 = scmp.ne.s32.totalorder %s76, %s77
      %p89 = scmp.eq.s32.totalorder %s30, 1
      %p90 = por %p88, %p89
      %p92 = scmp.ne.s32.totalorder %s77, %s91
      %p93 = scmp.eq.s32.totalorder %s30, 0
      %p94 = por %p92, %p93
      %s96 = sadd.s32 %s95, 1
      %p99 = scmp.eq.s32.totalorder %s24, 1
      %p100 = scmp.ne.s32.totalorder %s95, %s97
      %p101 = scmp.eq.s32.totalorder %s24, 0
      %p102 = por %p100, %p101
      %p103 = scmp.ne.s32.totalorder %s95, %s97
      %p104 = scmp.eq.s32.totalorder %s29, 1
      %p105 = por %p103, %p104
      %p106 = scmp.ne.s32.totalorder %s97, %s98
      %p107 = scmp.eq.s32.totalorder %s29, 0
      %p108 = por %p106, %p107
      %p109 = scmp.ne.s32.totalorder %s97, %s98
      %p110 = scmp.eq.s32.totalorder %s30, 1
      %p111 = por %p109, %p110
      %p113 = scmp.ne.s32.totalorder %s98, %s112
      %p114 = scmp.eq.s32.totalorder %s30, 0
      %p115 = por %p113, %p114
      %s117 = sadd.s32 %s116, 1
      %p120 = scmp.eq.s32.totalorder %s24, 1
      %p121 = scmp.ne.s32.totalorder %s116, %s118
      %p122 = scmp.eq.s32.totalorder %s24, 0
      %p123 = por %p121, %p122
      %p124 = scmp.ne.s32.totalorder %s116, %s118
      %p125 = scmp.eq.s32.totalorder %s29, 1
      %p126 = por %p124, %p125
      %p127 = scmp.ne.s32.totalorder %s118, %s119
      %p128 = scmp.eq.s32.totalorder %s29, 0
      %p129 = por %p127, %p128
      %p130 = scmp.ne.s32.totalorder %s118, %s119
      %p131 = scmp.eq.s32.totalorder %s30, 1
      %p132 = por %p130, %p131
      %p134 = scmp.ne.s32.totalorder %s119, %s133
      %p135 = scmp.eq.s32.totalorder %s30, 0
      %p136 = por %p134, %p135
      %s138 = sadd.s32 %s137, 1
      %p141 = scmp.eq.s32.totalorder %s24, 1
      %p142 = scmp.ne.s32.totalorder %s137, %s139
      %p143 = scmp.eq.s32.totalorder %s24, 0
      %p144 = por %p142, %p143
      %p145 = scmp.ne.s32.totalorder %s137, %s139
      %p146 = scmp.eq.s32.totalorder %s29, 1
      %p147 = por %p145, %p146
      %p148 = scmp.ne.s32.totalorder %s139, %s140
      %p149 = scmp.eq.s32.totalorder %s29, 0
      %p150 = por %p148, %p149
      %p151 = scmp.ne.s32.totalorder %s139, %s140
      %p152 = scmp.eq.s32.totalorder %s30, 1
      %p153 = por %p151, %p152
      %p155 = scmp.ne.s32.totalorder %s140, %s154
      %p156 = scmp.eq.s32.totalorder %s30, 0
      %p157 = por %p155, %p156
      %s159 = sadd.s32 %s158, 1
      %p162 = scmp.eq.s32.totalorder %s24, 1
      %p163 = scmp.ne.s32.totalorder %s158, %s160
      %p164 = scmp.eq.s32.totalorder %s24, 0
      %p165 = por %p163, %p164
      %p166 = scmp.ne.s32.totalorder %s158, %s160
      %p167 = scmp.eq.s32.totalorder %s29, 1
      %p168 = por %p166, %p167
      %p169 = scmp.ne.s32.totalorder %s160, %s161
      %p170 = scmp.eq.s32.totalorder %s29, 0
      %p171 = por %p169, %p170
      %p172 = scmp.ne.s32.totalorder %s160, %s161
      %p173 = scmp.eq.s32.totalorder %s30, 1
      %p174 = por %p172, %p173
      %p176 = scmp.ne.s32.totalorder %s161, %s175
      %p177 = scmp.eq.s32.totalorder %s30, 0
      %p178 = por %p176, %p177
      %s180 = sadd.s32 %s179, 1
      %p183 = scmp.eq.s32.totalorder %s24, 1
      %p184 = scmp.ne.s32.totalorder %s179, %s181
      %p185 = scmp.eq.s32.totalorder %s24, 0
      %p186 = por %p184, %p185
      %p187 = scmp.ne.s32.totalorder %s179, %s181
      %p188 = scmp.eq.s32.totalorder %s29, 1
      %p189 = por %p187, %p188
      %p190 = scmp.ne.s32.totalorder %s181, %s182
      %p191 = scmp.eq.s32.totalorder %s29, 0
      %p192 = por %p190, %p191
      %p193 = scmp.ne.s32.totalorder %s181, %s182
      %p194 = scmp.eq.s32.totalorder %s30, 1
      %p195 = por %p193, %p194
      %p197 = scmp.ne.s32.totalorder %s182, %s196
      %p198 = scmp.eq.s32.totalorder %s30, 0
      %p199 = por %p197, %p198
      %s201 = sadd.s32 %s200, 1
      %p204 = scmp.eq.s32.totalorder %s24, 1
      %p205 = scmp.ne.s32.totalorder %s200, %s202
      %p206 = scmp.eq.s32.totalorder %s24, 0
      %p207 = por %p205, %p206
      %p208 = scmp.ne.s32.totalorder %s200, %s202
      %p209 = scmp.eq.s32.totalorder %s29, 1
      %p210 = por %p208, %p209
      %p211 = scmp.ne.s32.totalorder %s202, %s203
      %p212 = scmp.eq.s32.totalorder %s29, 0
      %p213 = por %p211, %p212
      %p214 = scmp.ne.s32.totalorder %s202, %s203
      %p215 = scmp.eq.s32.totalorder %s30, 1
      %p216 = por %p214, %p215
      %p218 = scmp.ne.s32.totalorder %s203, %s217
      %p219 = scmp.eq.s32.totalorder %s30, 0
      %p220 = por %p218, %p219
      %s222 = sadd.s32 %s221, 1
      %p225 = scmp.eq.s32.totalorder %s24, 1
      %p226 = scmp.ne.s32.totalorder %s221, %s223
      %p227 = scmp.eq.s32.totalorder %s24, 0
      %p228 = por %p226, %p227
      %p229 = scmp.ne.s32.totalorder %s221, %s223
      %p230 = scmp.eq.s32.totalorder %s29, 1
      %p231 = por %p229, %p230
      %p232 = scmp.ne.s32.totalorder %s223, %s224
      %p233 = scmp.eq.s32.totalorder %s29, 0
      %p234 = por %p232, %p233
      %p235 = scmp.ne.s32.totalorder %s223, %s224
      %p236 = scmp.eq.s32.totalorder %s30, 1
      %p237 = por %p235, %p236
      %p239 = scmp.ne.s32.totalorder %s224, %s238
      %p240 = scmp.eq.s32.totalorder %s30, 0
      %p241 = por %p239, %p240
      %s242 = smul.u32 %s32, %s31
      %s243 = smul.u32 %s39, %s43
      %s244 = ssub.s32 %s242, %s243
      %p245 = scmp.eq.s32.totalorder %s244, 0
      %s247 = sadd.s32 %s246, 1
      %s248 = scalar_select %p245, %s246, %s247
      %p251 = pneg %p245
      %p252 = scmp.eq.s32.totalorder %s24, 1
      %p253 = por %p251, %p252
      %p254 = scmp.ne.s32.totalorder %s246, %s249
      %p255 = scmp.eq.s32.totalorder %s24, 0
      %p256 = por %p254, %p255
      %p257 = scmp.ne.s32.totalorder %s246, %s249
      %p258 = scmp.eq.s32.totalorder %s29, 1
      %p259 = por %p257, %p258
      %p260 = scmp.ne.s32.totalorder %s249, %s250
      %p261 = scmp.eq.s32.totalorder %s29, 0
      %p262 = por %p260, %p261
      %p263 = scmp.ne.s32.totalorder %s249, %s250
      %p264 = scmp.eq.s32.totalorder %s30, 1
      %p265 = por %p263, %p264
      %p267 = scmp.ne.s32.totalorder %s250, %s266
      %p268 = scmp.eq.s32.totalorder %s30, 0
      %p269 = por %p267, %p268
      %p270 = scmp.le.s32.totalorder 1, %s24
      %p271 = scmp.lt.s32.totalorder %s24, 3
      %p272 = pnand %p270, %p271
      %p273 = pneg %p272
      // Predicated region
      $region9: #{tpu_custom_call.1} parent=5 // pred_check
        _
      $region10: #{tpu_custom_call.1} parent=5 // pred_check_branch
        %275 = sbr.rel (%p272) target = $region12
      $region11: #{tpu_custom_call.1} parent=5 // pred_region
        %s276 = ssub.s32 %s24, 1
        // Predicated region
        $region13: #{tpu_custom_call.1} parent=11 // pred_check
          %p277 = pneg %p87
        $region14: #{tpu_custom_call.1} parent=11 // pred_check_branch
          %279 = sbr.rel (%p277) target = $region16
        $region15: #{tpu_custom_call.1} parent=11 // pred_region
          %281 = vsyncadd [#allocation8], 0
          %s282 = sshll.u32 %s1, 4
          %s283 = int_to_ptr.hbm [resolvable:$true] %s282
          %s284 = sshll.u32 [#allocation7], 4
          %s285 = int_to_ptr.vmem [resolvable:$true] %s284
          %290 = dma.hbm_to_vmem [thread:$0]  %s283, 128, %s285, [#allocation8], 64, 64, 4
        $region16: #{tpu_custom_call.1} parent=11 // pred_fallthru
          _
        // Predicated region
        $region17: #{tpu_custom_call.1} parent=11 // pred_check
          %p291 = pneg %p108
        $region18: #{tpu_custom_call.1} parent=11 // pred_check_branch
          %293 = sbr.rel (%p291) target = $region20
        $region19: #{tpu_custom_call.1} parent=11 // pred_region
          %295 = vsyncadd [#allocation8], 0
          %s296 = sshll.u32 %s2, 4
          %s297 = int_to_ptr.hbm [resolvable:$true] %s296
          %s298 = sshll.u32 [#allocation9], 4
          %s299 = int_to_ptr.vmem [resolvable:$true] %s298
          %304 = dma.hbm_to_vmem [thread:$0]  %s297, 1024, %s299, [#allocation8], 64, 64, 4
        $region20: #{tpu_custom_call.1} parent=11 // pred_fallthru
          _
        // Predicated region
        $region21: #{tpu_custom_call.1} parent=11 // pred_check
          %p305 = pneg %p129
        $region22: #{tpu_custom_call.1} parent=11 // pred_check_branch
          %307 = sbr.rel (%p305) target = $region24
        $region23: #{tpu_custom_call.1} parent=11 // pred_region
          %309 = vsyncadd [#allocation11], 0
          %s310 = sshll.u32 %s3, 4
          %s311 = int_to_ptr.hbm [resolvable:$true] %s310
          %s312 = sshll.u32 [#allocation10], 4
          %s313 = int_to_ptr.vmem [resolvable:$true] %s312
          %318 = dma.hbm_to_vmem [thread:$0]  %s311, 1024, %s313, [#allocation11], 64, 64, 4
        $region24: #{tpu_custom_call.1} parent=11 // pred_fallthru
          _
        // Predicated region
        $region25: #{tpu_custom_call.1} parent=11 // pred_check
          %p319 = pneg %p150
        $region26: #{tpu_custom_call.1} parent=11 // pred_check_branch
          %321 = sbr.rel (%p319) target = $region28
        $region27: #{tpu_custom_call.1} parent=11 // pred_region
          _
        $region28: #{tpu_custom_call.1} parent=11 // pred_fallthru
          _
        // Predicated region
        $region29: #{tpu_custom_call.1} parent=11 // pred_check
          %p322 = pneg %p171
        $region30: #{tpu_custom_call.1} parent=11 // pred_check_branch
          %324 = sbr.rel (%p322) target = $region32
        $region31: #{tpu_custom_call.1} parent=11 // pred_region
          %326 = vsyncadd [#allocation11], 0
          %s327 = sshll.u32 %s5, 4
          %s328 = int_to_ptr.hbm [resolvable:$true] %s327
          %s329 = sshll.u32 [#allocation12], 4
          %s330 = int_to_ptr.vmem [resolvable:$true] %s329
          %335 = dma.hbm_to_vmem [thread:$0]  %s328, 1024, %s330, [#allocation11], 64, 64, 4
        $region32: #{tpu_custom_call.1} parent=11 // pred_fallthru
          _
        // Predicated region
        $region33: #{tpu_custom_call.1} parent=11 // pred_check
          %p336 = pneg %p192
        $region34: #{tpu_custom_call.1} parent=11 // pred_check_branch
          %338 = sbr.rel (%p336) target = $region36
        $region35: #{tpu_custom_call.1} parent=11 // pred_region
          %340 = vsyncadd [#allocation14], 0
          %s341 = sshll.u32 %s6, 4
          %s342 = int_to_ptr.hbm [resolvable:$true] %s341
          %s343 = sshll.u32 [#allocation13], 4
          %s344 = int_to_ptr.vmem [resolvable:$true] %s343
          %349 = dma.hbm_to_vmem [thread:$0]  %s342, 1024, %s344, [#allocation14], 64, 64, 4
        $region36: #{tpu_custom_call.1} parent=11 // pred_fallthru
          _
        // Predicated region
        $region37: #{tpu_custom_call.1} parent=11 // pred_check
          %p350 = pneg %p213
        $region38: #{tpu_custom_call.1} parent=11 // pred_check_branch
          %352 = sbr.rel (%p350) target = $region40
        $region39: #{tpu_custom_call.1} parent=11 // pred_region
          _
        $region40: #{tpu_custom_call.1} parent=11 // pred_fallthru
          _
        // Predicated region
        $region41: #{tpu_custom_call.1} parent=11 // pred_check
          %p353 = pneg %p234
        $region42: #{tpu_custom_call.1} parent=11 // pred_check_branch
          %355 = sbr.rel (%p353) target = $region44
        $region43: #{tpu_custom_call.1} parent=11 // pred_region
          _
        $region44: #{tpu_custom_call.1} parent=11 // pred_fallthru
          _
      $region12: #{tpu_custom_call.1} parent=5 // pred_fallthru
        _
      %p356 = scmp.lt.s32.totalorder %s24, 2
      // Predicated region
      $region45: #{tpu_custom_call.1} parent=5 // pred_check
        %p357 = pneg %p356
      $region46: #{tpu_custom_call.1} parent=5 // pred_check_branch
        %359 = sbr.rel (%p357) target = $region48
      $region47: #{tpu_custom_call.1} parent=5 // pred_region
        // Predicated region
        $region49: #{tpu_custom_call.1} parent=47 // pred_check
          %p360 = pneg %p60
        $region50: #{tpu_custom_call.1} parent=47 // pred_check_branch
          %362 = sbr.rel (%p360) target = $region52
        $region51: #{tpu_custom_call.1} parent=47 // pred_region
          %s363 = sand.u32 %s50, 1
          %s364 = scalar_lea.sflag [#allocation5], %s363
          %s365 = sand.u32 %s50, 1
          %s366 = smul.addr %s365, 8
          %s367 = scalar_lea.vmem [#allocation4], %s366
          %s368 = ssub.s32 1, %s31
          %s369 = smul.u32 %s32, %s368
          %s370 = smul.u32 2, %s369
          %372 = vsyncadd %s364, 0
          %s373 = smul.addr %s370, 4
          %s374 = scalar_lea.hbm %s0, %s373
          %s375 = sshll.u32 %s374, 4
          %s376 = int_to_ptr.hbm [resolvable:$true] %s375
          %s377 = sshll.u32 %s367, 4
          %s378 = int_to_ptr.vmem [resolvable:$true] %s377
          %383 = dma.hbm_to_vmem [thread:$0]  %s376, 128, %s378, %s364, 64, 64, 4
        $region52: #{tpu_custom_call.1} parent=47 // pred_fallthru
          _
      $region48: #{tpu_custom_call.1} parent=5 // pred_fallthru
        _
      %p384 = scmp.le.s32.totalorder 1, %s24
      %p385 = scmp.lt.s32.totalorder %s24, 3
      %p386 = pnand %p384, %p385
      %p387 = pneg %p386
      // Predicated region
      $region53: #{tpu_custom_call.1} parent=5 // pred_check
        _
      $region54: #{tpu_custom_call.1} parent=5 // pred_check_branch
        %389 = sbr.rel (%p386) target = $region56
      $region55: #{tpu_custom_call.1} parent=5 // pred_region
        %s390 = ssub.s32 %s24, 1
        %s391 = sand.u32 %s53, 1
        %s392 = scalar_lea.sflag [#allocation5], %s391
        %s393 = sand.u32 %s53, 1
        %s394 = smul.addr %s393, 8
        %s395 = scalar_lea.vmem [#allocation4], %s394
        // Predicated region
        $region57: #{tpu_custom_call.1} parent=55 // pred_check
          %p396 = pneg %p66
        $region58: #{tpu_custom_call.1} parent=55 // pred_check_branch
          %398 = sbr.rel (%p396) target = $region60
        $region59: #{tpu_custom_call.1} parent=55 // pred_region
          %400 = dma.done %s392, 128
        $region60: #{tpu_custom_call.1} parent=55 // pred_fallthru
          _
        // Predicated region
        $region61: #{tpu_custom_call.1} parent=55 // pred_check
          %p401 = pneg %p87
        $region62: #{tpu_custom_call.1} parent=55 // pred_check_branch
          %403 = sbr.rel (%p401) target = $region64
        $region63: #{tpu_custom_call.1} parent=55 // pred_region
          %405 = dma.done [#allocation8], 128
        $region64: #{tpu_custom_call.1} parent=55 // pred_fallthru
          _
        // Predicated region
        $region65: #{tpu_custom_call.1} parent=55 // pred_check
          %p406 = pneg %p108
        $region66: #{tpu_custom_call.1} parent=55 // pred_check_branch
          %408 = sbr.rel (%p406) target = $region68
        $region67: #{tpu_custom_call.1} parent=55 // pred_region
          %410 = dma.done [#allocation8], 1024
        $region68: #{tpu_custom_call.1} parent=55 // pred_fallthru
          _
        // Predicated region
        $region69: #{tpu_custom_call.1} parent=55 // pred_check
          %p411 = pneg %p129
        $region70: #{tpu_custom_call.1} parent=55 // pred_check_branch
          %413 = sbr.rel (%p411) target = $region72
        $region71: #{tpu_custom_call.1} parent=55 // pred_region
          %415 = dma.done [#allocation11], 1024
        $region72: #{tpu_custom_call.1} parent=55 // pred_fallthru
          _
        // Predicated region
        $region73: #{tpu_custom_call.1} parent=55 // pred_check
          %p416 = pneg %p171
        $region74: #{tpu_custom_call.1} parent=55 // pred_check_branch
          %418 = sbr.rel (%p416) target = $region76
        $region75: #{tpu_custom_call.1} parent=55 // pred_region
          %420 = dma.done [#allocation11], 1024
        $region76: #{tpu_custom_call.1} parent=55 // pred_fallthru
          _
        // Predicated region
        $region77: #{tpu_custom_call.1} parent=55 // pred_check
          %p421 = pneg %p192
        $region78: #{tpu_custom_call.1} parent=55 // pred_check_branch
          %423 = sbr.rel (%p421) target = $region80
        $region79: #{tpu_custom_call.1} parent=55 // pred_region
          %425 = dma.done [#allocation14], 1024
        $region80: #{tpu_custom_call.1} parent=55 // pred_fallthru
          _
        %s426 = sand.u32 %s53, 1
        %s427 = scalar_lea.sflag [#allocation5], %s426
        %s428 = sand.u32 %s53, 1
        %s429 = smul.addr %s428, 8
        %s430 = scalar_lea.vmem [#allocation4], %s429
        %p431 = pneg %p66
        %p432 = pneg %p63
        %p433 = pneg %p87
        %p434 = pneg %p84
        %p435 = pneg %p108
        %p436 = pneg %p105
        %p437 = pneg %p129
        %p438 = pneg %p126
        %p439 = pneg %p150
        %p440 = pneg %p147
        %p441 = pneg %p171
        %p442 = pneg %p168
        %p443 = pneg %p192
        %p444 = pneg %p189
        %p445 = pneg %p213
        %p446 = pneg %p210
        %p447 = pneg %p234
        %p448 = pneg %p231
        %p449 = pneg %p262
        %p450 = pneg %p259
        %s451 = sand.u32 %s249, 1
        %s452 = scalar_lea.sflag [#allocation6], %s451
        %s453 = sand.u32 %s249, 1
        %s454 = smul.addr %s453, 16
        %s455 = scalar_lea.vmem [#allocation15], %s454
        %s456 = ssub.s32 1, %s33
        %s457 = smul.u32 %s34, %s456
        %s458 = smul.u32 2, %s457
        %s459 = smul.u32 %s34, %s33
        %s460 = smul.u32 2, %s459
        %s462 = smul.u32 %s34, 16
        %p463 = scmp.eq.s32.totalorder %s33, 0
        // Predicated region
        $region81: #{tpu_custom_call.1} parent=55 // pred_check
          %p464 = pneg %p463
        $region82: #{tpu_custom_call.1} parent=55 // pred_check_branch
          %466 = sbr.rel (%p464) target = $region84
        $region83: #{tpu_custom_call.1} parent=55 // pred_region
          %v467 = vld [vmem:[%s395] sm:$0xf]
          %v468 = vld [vmem:[%s395 + $0x4] sm:$0xf]
          %v469 = vld [vmem:[#allocation7] sm:$0xf]
          %v470 = vld [vmem:[#allocation7 + $0x4] sm:$0xf]
          %s471 = sshra.s32 %s462, 3
          %s472 = sand.u32 %s462, 7
          %s473 = smul.addr %s471, 4
          %s474 = scalar_lea.vmem [#allocation7], %s473
          %v475 = vld [vmem:[%s474] sm:$0xf]
          %v476 = vld [vmem:[%s474 + $0x4] sm:$0xf]
          %v479 = vunpack.c.l.b16 %v467
          %v480 = vunpack.c.l.b16 %v468
          %v481 = vpack.c.b16 %v480, %v479
          %v484 = vunpack.c.l.b16 %v469
          %v485 = vunpack.c.l.b16 %v470
          %v486 = vpack.c.b16 %v485, %v484
          %vm488 = vcmask 130048
          %v490 = vsel %vm488, %v481, 0
          %492 = vmatpush.bf16.msra.mxu0 0
          %493 = vmatpush.bf16.msra.mxu0 0
          %494 = vmatpush.bf16.msra.mxu0 0
          %495 = vmatpush.bf16.msra.mxu0 0
          %496 = vmatpush.bf16.msra.mxu0 0
          %497 = vmatpush.bf16.msra.mxu0 0
          %498 = vmatpush.bf16.msra.mxu0 0
          %499 = vmatpush.bf16.msra.mxu0 %v486
          %500 = vmatmul.bf16.gmra.mxu0 %v490
          %v501 = vpop.f32.mrf.mxu0
          %v502 = vadd.f32 0.0, %v501
          %v503 = vpop.f32.mrf.mxu0
          %v504 = vadd.f32 0.0, %v503
          %505 = vdwg.mxu0
          %v506 = vld [vmem:[#allocation9] sm:$0xf]
          %v507 = vld [vmem:[#allocation9 + $0x4] sm:$0xf]
          %v508 = vld [vmem:[#allocation9 + $0x8] sm:$0xf]
          %v509 = vld [vmem:[#allocation9 + $0xc] sm:$0xf]
          %v510 = vld [vmem:[#allocation9 + $0x10] sm:$0xf]
          %v511 = vld [vmem:[#allocation9 + $0x14] sm:$0xf]
          %v512 = vld [vmem:[#allocation9 + $0x18] sm:$0xf]
          %v513 = vld [vmem:[#allocation9 + $0x1c] sm:$0xf]
          %v514 = vld [vmem:[#allocation9 + $0x20] sm:$0xf]
          %v515 = vld [vmem:[#allocation9 + $0x24] sm:$0xf]
          %v516 = vld [vmem:[#allocation9 + $0x28] sm:$0xf]
          %v517 = vld [vmem:[#allocation9 + $0x2c] sm:$0xf]
          %v518 = vld [vmem:[#allocation9 + $0x30] sm:$0xf]
          %v519 = vld [vmem:[#allocation9 + $0x34] sm:$0xf]
          %v520 = vld [vmem:[#allocation9 + $0x38] sm:$0xf]
          %v521 = vld [vmem:[#allocation9 + $0x3c] sm:$0xf]
          %v522 = vpack.c.bf16 %v504, %v502
          %v523 = vld [vmem:[#allocation10] sm:$0xf]
          %v524 = vld [vmem:[#allocation10 + $0x4] sm:$0xf]
          %v525 = vld [vmem:[#allocation10 + $0x8] sm:$0xf]
          %v526 = vld [vmem:[#allocation10 + $0xc] sm:$0xf]
          %v527 = vld [vmem:[#allocation10 + $0x10] sm:$0xf]
          %v528 = vld [vmem:[#allocation10 + $0x14] sm:$0xf]
          %v529 = vld [vmem:[#allocation10 + $0x18] sm:$0xf]
          %v530 = vld [vmem:[#allocation10 + $0x1c] sm:$0xf]
          %v531 = vld [vmem:[#allocation10 + $0x20] sm:$0xf]
          %v532 = vld [vmem:[#allocation10 + $0x24] sm:$0xf]
          %v533 = vld [vmem:[#allocation10 + $0x28] sm:$0xf]
          %v534 = vld [vmem:[#allocation10 + $0x2c] sm:$0xf]
          %v535 = vld [vmem:[#allocation10 + $0x30] sm:$0xf]
          %v536 = vld [vmem:[#allocation10 + $0x34] sm:$0xf]
          %v537 = vld [vmem:[#allocation10 + $0x38] sm:$0xf]
          %v538 = vld [vmem:[#allocation10 + $0x3c] sm:$0xf]
          %v555 = vunpack.c.l.b16 %v523
          %v556 = vunpack.c.l.b16 %v524
          %v557 = vunpack.c.l.b16 %v525
          %v558 = vunpack.c.l.b16 %v526
          %v559 = vunpack.c.l.b16 %v527
          %v560 = vunpack.c.l.b16 %v528
          %v561 = vunpack.c.l.b16 %v529
          %v562 = vunpack.c.l.b16 %v530
          %v563 = vunpack.c.l.b16 %v531
          %v564 = vunpack.c.l.b16 %v532
          %v565 = vunpack.c.l.b16 %v533
          %v566 = vunpack.c.l.b16 %v534
          %v567 = vunpack.c.l.b16 %v535
          %v568 = vunpack.c.l.b16 %v536
          %v569 = vunpack.c.l.b16 %v537
          %v570 = vunpack.c.l.b16 %v538
          %v571 = vpack.c.b16 %v556, %v555
          %v572 = vpack.c.b16 %v558, %v557
          %v573 = vpack.c.b16 %v560, %v559
          %v574 = vpack.c.b16 %v562, %v561
          %v575 = vpack.c.b16 %v564, %v563
          %v576 = vpack.c.b16 %v566, %v565
          %v577 = vpack.c.b16 %v568, %v567
          %v578 = vpack.c.b16 %v570, %v569
          %587 = vmatpush.bf16.msra.mxu0 %v578
          %588 = vmatpush.bf16.msra.mxu0 %v577
          %589 = vmatpush.bf16.msra.mxu0 %v576
          %590 = vmatpush.bf16.msra.mxu0 %v575
          %591 = vmatpush.bf16.msra.mxu0 %v574
          %592 = vmatpush.bf16.msra.mxu0 %v573
          %593 = vmatpush.bf16.msra.mxu0 %v572
          %594 = vmatpush.bf16.msra.mxu0 %v571
          %595 = vmatmul.bf16.gmra.mxu0 %v522
          %v596 = vpop.f32.mrf.mxu0
          %v597 = vadd.f32 0.0, %v596
          %v598 = vpop.f32.mrf.mxu0
          %v599 = vadd.f32 0.0, %v598
          %600 = vdwg.mxu0
          %v603 = vunpack.c.l.b16 %v475
          %v604 = vunpack.c.l.b16 %v476
          %v605 = vpack.c.b16 %v604, %v603
          %v623 = vunpack.c.l.b16 %v506
          %v624 = vunpack.c.l.b16 %v507
          %v625 = vunpack.c.l.b16 %v508
          %v626 = vunpack.c.l.b16 %v509
          %v627 = vunpack.c.l.b16 %v510
          %v628 = vunpack.c.l.b16 %v511
          %v629 = vunpack.c.l.b16 %v512
          %v630 = vunpack.c.l.b16 %v513
          %v631 = vunpack.c.l.b16 %v514
          %v632 = vunpack.c.l.b16 %v515
          %v633 = vunpack.c.l.b16 %v516
          %v634 = vunpack.c.l.b16 %v517
          %v635 = vunpack.c.l.b16 %v518
          %v636 = vunpack.c.l.b16 %v519
          %v637 = vunpack.c.l.b16 %v520
          %v638 = vunpack.c.l.b16 %v521
          %v639 = vpack.c.b16 %v624, %v623
          %v640 = vpack.c.b16 %v626, %v625
          %v641 = vpack.c.b16 %v628, %v627
          %v642 = vpack.c.b16 %v630, %v629
          %v643 = vpack.c.b16 %v632, %v631
          %v644 = vpack.c.b16 %v634, %v633
          %v645 = vpack.c.b16 %v636, %v635
          %v646 = vpack.c.b16 %v638, %v637
          %655 = vmatpush.bf16.msra.mxu0 %v646
          %656 = vmatpush.bf16.msra.mxu0 %v645
          %657 = vmatpush.bf16.msra.mxu0 %v644
          %658 = vmatpush.bf16.msra.mxu0 %v643
          %659 = vmatpush.bf16.msra.mxu0 %v642
          %660 = vmatpush.bf16.msra.mxu0 %v641
          %661 = vmatpush.bf16.msra.mxu0 %v640
          %662 = vmatpush.bf16.msra.mxu0 %v639
          %663 = vmatmul.bf16.gmra.mxu0 %v605
          %v664 = vpop.f32.mrf.mxu0
          %v665 = vadd.f32 %v597, %v664
          %v666 = vpop.f32.mrf.mxu0
          %v667 = vadd.f32 %v599, %v666
          %668 = vdwg.mxu0
          %v669 = vld [vmem:[%s4] sm:$0x1]
          %v671 = vperm.slane %v669, 0
          %v673 = vadd.f32 %v665, %v671
          %v674 = vadd.f32 %v667, %v671
          %v675 = vmax.f32 %v673, 0.0
          %v676 = vmax.f32 %v674, 0.0
          %v677 = vpack.c.bf16 %v676, %v675
          %v678 = vld [vmem:[#allocation12] sm:$0xf]
          %v679 = vld [vmem:[#allocation12 + $0x4] sm:$0xf]
          %v680 = vld [vmem:[#allocation12 + $0x8] sm:$0xf]
          %v681 = vld [vmem:[#allocation12 + $0xc] sm:$0xf]
          %v682 = vld [vmem:[#allocation12 + $0x10] sm:$0xf]
          %v683 = vld [vmem:[#allocation12 + $0x14] sm:$0xf]
          %v684 = vld [vmem:[#allocation12 + $0x18] sm:$0xf]
          %v685 = vld [vmem:[#allocation12 + $0x1c] sm:$0xf]
          %v686 = vld [vmem:[#allocation12 + $0x20] sm:$0xf]
          %v687 = vld [vmem:[#allocation12 + $0x24] sm:$0xf]
          %v688 = vld [vmem:[#allocation12 + $0x28] sm:$0xf]
          %v689 = vld [vmem:[#allocation12 + $0x2c] sm:$0xf]
          %v690 = vld [vmem:[#allocation12 + $0x30] sm:$0xf]
          %v691 = vld [vmem:[#allocation12 + $0x34] sm:$0xf]
          %v692 = vld [vmem:[#allocation12 + $0x38] sm:$0xf]
          %v693 = vld [vmem:[#allocation12 + $0x3c] sm:$0xf]
          %v694 = vld [vmem:[%s7] sm:$0x1]
          %v696 = vperm.slane %v694, 0
          %v714 = vunpack.c.l.b16 %v678
          %v715 = vunpack.c.l.b16 %v679
          %v716 = vunpack.c.l.b16 %v680
          %v717 = vunpack.c.l.b16 %v681
          %v718 = vunpack.c.l.b16 %v682
          %v719 = vunpack.c.l.b16 %v683
          %v720 = vunpack.c.l.b16 %v684
          %v721 = vunpack.c.l.b16 %v685
          %v722 = vunpack.c.l.b16 %v686
          %v723 = vunpack.c.l.b16 %v687
          %v724 = vunpack.c.l.b16 %v688
          %v725 = vunpack.c.l.b16 %v689
          %v726 = vunpack.c.l.b16 %v690
          %v727 = vunpack.c.l.b16 %v691
          %v728 = vunpack.c.l.b16 %v692
          %v729 = vunpack.c.l.b16 %v693
          %v730 = vpack.c.b16 %v715, %v714
          %v731 = vpack.c.b16 %v717, %v716
          %v732 = vpack.c.b16 %v719, %v718
          %v733 = vpack.c.b16 %v721, %v720
          %v734 = vpack.c.b16 %v723, %v722
          %v735 = vpack.c.b16 %v725, %v724
          %v736 = vpack.c.b16 %v727, %v726
          %v737 = vpack.c.b16 %v729, %v728
          %746 = vmatpush.bf16.msra.mxu0 %v737
          %747 = vmatpush.bf16.msra.mxu0 %v736
          %748 = vmatpush.bf16.msra.mxu0 %v735
          %749 = vmatpush.bf16.msra.mxu0 %v734
          %750 = vmatpush.bf16.msra.mxu0 %v733
          %751 = vmatpush.bf16.msra.mxu0 %v732
          %752 = vmatpush.bf16.msra.mxu0 %v731
          %753 = vmatpush.bf16.msra.mxu0 %v730
          %754 = vmatmul.bf16.gmra.mxu0 %v677
          %v755 = vpop.f32.mrf.mxu0
          %v756 = vadd.f32 %v696, %v755
          %v757 = vpop.f32.mrf.mxu0
          %v758 = vadd.f32 %v696, %v757
          %759 = vdwg.mxu0
          %s760 = scalar_lea.vmem [#allocation2], %s462
          %761 = vst [vmem:[%s760] sm:$0xff] %v756
          %762 = vst [vmem:[%s760 + $0x8] sm:$0xff] %v758
          %v763 = vld [vmem:[#allocation13] sm:$0xf]
          %v764 = vld [vmem:[#allocation13 + $0x4] sm:$0xf]
          %v765 = vld [vmem:[#allocation13 + $0x8] sm:$0xf]
          %v766 = vld [vmem:[#allocation13 + $0xc] sm:$0xf]
          %v767 = vld [vmem:[#allocation13 + $0x10] sm:$0xf]
          %v768 = vld [vmem:[#allocation13 + $0x14] sm:$0xf]
          %v769 = vld [vmem:[#allocation13 + $0x18] sm:$0xf]
          %v770 = vld [vmem:[#allocation13 + $0x1c] sm:$0xf]
          %v771 = vld [vmem:[#allocation13 + $0x20] sm:$0xf]
          %v772 = vld [vmem:[#allocation13 + $0x24] sm:$0xf]
          %v773 = vld [vmem:[#allocation13 + $0x28] sm:$0xf]
          %v774 = vld [vmem:[#allocation13 + $0x2c] sm:$0xf]
          %v775 = vld [vmem:[#allocation13 + $0x30] sm:$0xf]
          %v776 = vld [vmem:[#allocation13 + $0x34] sm:$0xf]
          %v777 = vld [vmem:[#allocation13 + $0x38] sm:$0xf]
          %v778 = vld [vmem:[#allocation13 + $0x3c] sm:$0xf]
          %v795 = vunpack.c.l.b16 %v763
          %v796 = vunpack.c.l.b16 %v764
          %v797 = vunpack.c.l.b16 %v765
          %v798 = vunpack.c.l.b16 %v766
          %v799 = vunpack.c.l.b16 %v767
          %v800 = vunpack.c.l.b16 %v768
          %v801 = vunpack.c.l.b16 %v769
          %v802 = vunpack.c.l.b16 %v770
          %v803 = vunpack.c.l.b16 %v771
          %v804 = vunpack.c.l.b16 %v772
          %v805 = vunpack.c.l.b16 %v773
          %v806 = vunpack.c.l.b16 %v774
          %v807 = vunpack.c.l.b16 %v775
          %v808 = vunpack.c.l.b16 %v776
          %v809 = vunpack.c.l.b16 %v777
          %v810 = vunpack.c.l.b16 %v778
          %v811 = vpack.c.b16 %v796, %v795
          %v812 = vpack.c.b16 %v798, %v797
          %v813 = vpack.c.b16 %v800, %v799
          %v814 = vpack.c.b16 %v802, %v801
          %v815 = vpack.c.b16 %v804, %v803
          %v816 = vpack.c.b16 %v806, %v805
          %v817 = vpack.c.b16 %v808, %v807
          %v818 = vpack.c.b16 %v810, %v809
          %827 = vmatpush.bf16.msra.mxu0 %v818
          %828 = vmatpush.bf16.msra.mxu0 %v817
          %829 = vmatpush.bf16.msra.mxu0 %v816
          %830 = vmatpush.bf16.msra.mxu0 %v815
          %831 = vmatpush.bf16.msra.mxu0 %v814
          %832 = vmatpush.bf16.msra.mxu0 %v813
          %833 = vmatpush.bf16.msra.mxu0 %v812
          %834 = vmatpush.bf16.msra.mxu0 %v811
          %835 = vmatmul.bf16.gmra.mxu0 %v677
          %v836 = vpop.f32.mrf.mxu0
          %v837 = vadd.f32 0.0, %v836
          %v838 = vpop.f32.mrf.mxu0
          %v839 = vadd.f32 0.0, %v838
          %840 = vdwg.mxu0
          %v841 = vpack.c.bf16 %v839, %v837
          %p842 = scmp.eq.s32.totalorder %s34, 0
          // Predicated region
          $region85: #{tpu_custom_call.1} parent=83 // pred_check
            %p843 = pneg %p842
          $region86: #{tpu_custom_call.1} parent=83 // pred_check_branch
            %845 = sbr.rel (%p843) target = $region88
          $region87: #{tpu_custom_call.1} parent=83 // pred_region
            %846 = vst [vmem:[#allocation3] sm:$0xff] 0.0
            %847 = vst [vmem:[#allocation3 + $0x8] sm:$0xff] 0.0
          $region88: #{tpu_custom_call.1} parent=83 // pred_fallthru
            _
          %v848 = vld [vmem:[#allocation3] sm:$0xff]
          %v849 = vld [vmem:[#allocation3 + $0x8] sm:$0xff]
          %851 = vxpose.xlu0.c.b16.start [1/8] %v481, 128
          %852 = vxpose.xlu0.c.b16.cont [2/8] 0, 128
          %853 = vxpose.xlu0.c.b16.cont [3/8] 0, 128
          %854 = vxpose.xlu0.c.b16.cont [4/8] 0, 128
          %855 = vxpose.xlu0.c.b16.cont [5/8] 0, 128
          %856 = vxpose.xlu0.c.b16.cont [6/8] 0, 128
          %857 = vxpose.xlu0.c.b16.cont [7/8] 0, 128
          %858 = vxpose.xlu0.c.b16.end [8/8] 0, 128
          %v859 = vpop.trf.xlu0
          %v860 = vpop.trf.xlu0
          %v861 = vpop.trf.xlu0
          %v862 = vpop.trf.xlu0
          %v863 = vpop.trf.xlu0
          %v864 = vpop.trf.xlu0
          %v865 = vpop.trf.xlu0
          %v866 = vpop.trf.xlu0
          %v868 = vsel %vm488, %v859, 0
          %870 = vmatpush.bf16.msra.mxu0 0
          %871 = vmatpush.bf16.msra.mxu0 0
          %872 = vmatpush.bf16.msra.mxu0 0
          %873 = vmatpush.bf16.msra.mxu0 0
          %874 = vmatpush.bf16.msra.mxu0 0
          %875 = vmatpush.bf16.msra.mxu0 0
          %876 = vmatpush.bf16.msra.mxu0 0
          %877 = vmatpush.bf16.msra.mxu0 %v841
          %878 = vmatmul.bf16.gmra.mxu0 %v868
          %v879 = vpop.f32.mrf.mxu0
          %v880 = vadd.f32 0.0, %v879
          %v881 = vpop.f32.mrf.mxu0
          %v882 = vadd.f32 0.0, %v881
          %883 = vdwg.mxu0
          %v884 = vadd.f32 %v848, %v880
          %v885 = vadd.f32 %v849, %v882
          %886 = vst [vmem:[#allocation3] sm:$0xff] %v884
          %887 = vst [vmem:[#allocation3 + $0x8] sm:$0xff] %v885
        $region84: #{tpu_custom_call.1} parent=55 // pred_fallthru
          _
        %p888 = scmp.eq.s32.totalorder %s33, 1
        // Predicated region
        $region89: #{tpu_custom_call.1} parent=55 // pred_check
          %p889 = pneg %p888
        $region90: #{tpu_custom_call.1} parent=55 // pred_check_branch
          %891 = sbr.rel (%p889) target = $region92
        $region91: #{tpu_custom_call.1} parent=55 // pred_region
          %s892 = scalar_lea.vmem [#allocation3], %s462
          %v893 = vld [vmem:[%s892] sm:$0xff]
          %v894 = vld [vmem:[%s892 + $0x8] sm:$0xff]
          %s895 = scalar_lea.vmem [#allocation2], %s462
          %v896 = vld [vmem:[%s895] sm:$0xff]
          %v897 = vld [vmem:[%s895 + $0x8] sm:$0xff]
          %v898 = vadd.f32 %v896, %v893
          %v899 = vadd.f32 %v897, %v894
          %v900 = vld [vmem:[%s8] sm:$0x1]
          %v902 = vperm.slane %v900, 0
          %v904 = vadd.f32 %v898, %v902
          %v905 = vadd.f32 %v899, %v902
          %906 = vmax.xlane.f32.xlu0 %v904
          %v907 = vpop.xlane.xlu0 %906
          %908 = vmax.xlane.f32.xlu0 %v905
          %v909 = vpop.xlane.xlu0 %908
          %v910 = vsub.f32 %v904, %v907
          %v911 = vsub.f32 %v905, %v909
          %v912 = vmul.f32 %v910, 1.442695
          %v913 = vpow.pop %v912
          %v914 = vmul.f32 %v911, 1.442695
          %v915 = vpow.pop %v914
          %916 = vadd.xlane.f32.xlu0 %v913
          %v917 = vpop.xlane.xlu0 %916
          %918 = vadd.xlane.f32.xlu0 %v915
          %v919 = vpop.xlane.xlu0 %918
          %v920 = vlog2.pop %v917
          %v921 = vmul.f32 %v920, 0.6931472
          %v922 = vlog2.pop %v919
          %v923 = vmul.f32 %v922, 0.6931472
          %v924 = vadd.f32 %v907, %v921
          %v925 = vadd.f32 %v909, %v923
          %v926 = vsub.f32 %v904, %v924
          %v927 = vsub.f32 %v905, %v925
          %928 = vst [vmem:[%s455] sm:$0xff] %v926
          %929 = vst [vmem:[%s455 + $0x8] sm:$0xff] %v927
        $region92: #{tpu_custom_call.1} parent=55 // pred_fallthru
          _
        %s930 = sand.u32 %s249, 1
        %s931 = scalar_lea.sflag [#allocation6], %s930
        %s932 = sand.u32 %s249, 1
        %s933 = smul.addr %s932, 16
        %s934 = scalar_lea.vmem [#allocation15], %s933
        // Predicated region
        $region93: #{tpu_custom_call.1} parent=55 // pred_check
          %p935 = pneg %p259
        $region94: #{tpu_custom_call.1} parent=55 // pred_check_branch
          %937 = sbr.rel (%p935) target = $region96
        $region95: #{tpu_custom_call.1} parent=55 // pred_region
          %s938 = smul.u32 %s34, %s33
          %s939 = smul.u32 2, %s938
          %941 = vsyncadd %s931, 0
          %s942 = smul.addr %s939, 8
          %s943 = scalar_lea.hbm %s9, %s942
          %s944 = sshll.u32 %s934, 4
          %s945 = int_to_ptr.vmem [resolvable:$true] %s944
          %s946 = sshll.u32 %s943, 4
          %s947 = int_to_ptr.hbm [resolvable:$true] %s946
          %952 = dma.vmem_to_hbm [thread:$0]  %s945, 256, %s947, %s931, 128, 128, 8
        $region96: #{tpu_custom_call.1} parent=55 // pred_fallthru
          _
      $region56: #{tpu_custom_call.1} parent=5 // pred_fallthru
        _
      %p953 = scmp.le.s32.totalorder 2, %s24
      // Predicated region
      $region97: #{tpu_custom_call.1} parent=5 // pred_check
        %p954 = pneg %p953
      $region98: #{tpu_custom_call.1} parent=5 // pred_check_branch
        %956 = sbr.rel (%p954) target = $region100
      $region99: #{tpu_custom_call.1} parent=5 // pred_region
        %s957 = ssub.s32 %s24, 2
        // Predicated region
        $region101: #{tpu_custom_call.1} parent=99 // pred_check
          %p958 = pneg %p265
        $region102: #{tpu_custom_call.1} parent=99 // pred_check_branch
          %960 = sbr.rel (%p958) target = $region104
        $region103: #{tpu_custom_call.1} parent=99 // pred_region
          %s961 = sand.u32 %s250, 1
          %s962 = scalar_lea.sflag [#allocation6], %s961
          %s963 = sand.u32 %s250, 1
          %s964 = smul.addr %s963, 16
          %s965 = scalar_lea.vmem [#allocation15], %s964
          %967 = dma.done %s962, 256
        $region104: #{tpu_custom_call.1} parent=99 // pred_fallthru
          _
      $region100: #{tpu_custom_call.1} parent=5 // pred_fallthru
        _
    $region6: #{tpu_custom_call.1} parent=1 // loop_footer
      %s28 = sadd.s32 1, %s24
    $region7: #{tpu_custom_call.1} parent=1 // loop_footer_branch
      %23 = sbr.rel target = $region3
    $region8: #{tpu_custom_call.1} parent=1 // loop_exit
      _
    %968 = vsyncpa [#allocation5], 1
    %s969 = scalar_lea.sflag [#allocation5], 1
    %970 = vsyncpa %s969, 1
    %971 = vsyncpa [#allocation8], 1
    %972 = vsyncpa [#allocation11], 1
    %973 = vsyncpa [#allocation14], 1
    %974 = vsyncpa [#allocation6], 1
    %s975 = scalar_lea.sflag [#allocation6], 1
    %976 = vsyncpa %s975, 1

</llo_original>
